<compile_context>
chip_gen: v5e
topology: v5e:2x2
jax: 0.10.0
libtpu: 0.0.40
codegen_flags: <defaults>
</compile_context>

<pallas_src>
import functools

import numpy as np
import jax
import jax.numpy as jnp
from jax.experimental import pallas as pl
from jax.experimental.pallas import tpu as pltpu


# ----------------------------- tiling helpers --------------------------------

def _round_up(x, m):
    return ((x + m - 1) // m) * m


def _row_tile(m, row_bytes, target=4 << 20):
    """Row tiling for (m, C)-style kernels; ~target bytes per block, no pad if possible."""
    cap = max(8, (target // max(row_bytes, 1)) // 8 * 8)
    if m <= cap:
        return m, m                       # single full-extent block, no padding
    if m % 8 == 0:
        t = cap
        while m % t:
            t -= 8
        return m, t
    mp = _round_up(m, cap)
    return mp, cap                        # caller pads (rare)


def _mm_tile(d, cap, align):
    """Tile one matmul dim: full-extent block if it fits, else an aligned divisor."""
    if d <= cap:
        return d, d
    if d % align == 0:
        t = (cap // align) * align
        while d % t:
            t -= align
        return d, t
    dp = _round_up(d, cap)
    return dp, cap


_MM_PARAMS = pltpu.CompilerParams(
    dimension_semantics=("parallel", "parallel", "arbitrary"),
    vmem_limit_bytes=64 * 1024 * 1024)


# ----------------------------- tiled bf16 matmul (1x1 convs) ------------------

def _mm_kernel(x_ref, w_ref, o_ref, acc_ref, *, k_steps):
    @pl.when(pl.program_id(2) == 0)
    def _init():
        acc_ref[...] = jnp.zeros_like(acc_ref)

    acc_ref[...] += jnp.dot(x_ref[...], w_ref[...],
                            preferred_element_type=jnp.float32)

    @pl.when(pl.program_id(2) == k_steps - 1)
    def _done():
        o_ref[...] = acc_ref[...].astype(o_ref.dtype)


def matmul_bf16(x, w, tm_cap=512, tn_cap=512, tk_cap=1024):
    """x:(M,K) bf16, w:(K,N) bf16 -> (M,N) bf16.  MXU matmul, f32 VMEM accumulator."""
    M, K = x.shape
    K2, N = w.shape
    assert K == K2
    Mp, tm = _mm_tile(M, tm_cap, 8)
    Kp, tk = _mm_tile(K, tk_cap, 128)
    Np, tn = _mm_tile(N, tn_cap, 128)
    xb = x.astype(jnp.bfloat16)
    wb = w.astype(jnp.bfloat16)
    if Mp != M or Kp != K:
        xb = jnp.pad(xb, ((0, Mp - M), (0, Kp - K)))
    if Kp != K or Np != N:
        wb = jnp.pad(wb, ((0, Kp - K), (0, Np - N)))
    grid = (Mp // tm, Np // tn, Kp // tk)
    out = pl.pallas_call(
        functools.partial(_mm_kernel, k_steps=grid[2]),
        out_shape=jax.ShapeDtypeStruct((Mp, Np), jnp.bfloat16),
        grid=grid,
        in_specs=[pl.BlockSpec((tm, tk), lambda i, j, k: (i, k)),
                  pl.BlockSpec((tk, tn), lambda i, j, k: (k, j))],
        out_specs=pl.BlockSpec((tm, tn), lambda i, j, k: (i, j)),
        scratch_shapes=[pltpu.VMEM((tm, tn), jnp.float32)],
        compiler_params=_MM_PARAMS,
    )(xb, wb)
    if Mp != M or Np != N:
        out = out[:M, :N]
    return out


# ----------------------------- grouped 3x3 conv (tap accumulation) -------------

def _gconv_kernel(x_ref, w_ref, o_ref, acc_ref, *, wp, hpwp):
    # One (image, 128-channel output band) per grid step; 9 taps accumulated in-kernel.
    acc_ref[...] = jnp.zeros_like(acc_ref)
    for di in range(3):
        for dj in range(3):
            shift = di * wp + dj
            xs = x_ref[0, shift:shift + hpwp, :]        # (HpWp, 128) bf16, shifted window
            wk = w_ref[0, di * 3 + dj]                  # (128, 128) band weight for tap
            acc_ref[...] += jnp.dot(xs, wk, preferred_element_type=jnp.float32)
    o_ref[0] = acc_ref[...].astype(o_ref.dtype)


def grouped_conv3x3(x_flat, n, h, w, c, w_band, stride):
    """32-group 3x3 conv, pad=1, stride in {1,2}.  x_flat: (n*h*w, c) bf16 -> (M_out, c)."""
    hp, wp = h + 2, w + 2
    hpwp = hp * wp
    extra = 2 * wp + 2                                   # halo rows for the last positions
    x4 = x_flat.reshape(n, h, w, c)
    xp = jnp.pad(x4, ((0, 0), (1, 1), (1, 1), (0, 0)))   # spatial zero pad
    x3 = jnp.pad(xp.reshape(n, hpwp, c), ((0, 0), (0, extra), (0, 0)))
    nb = c // 128
    out = pl.pallas_call(
        functools.partial(_gconv_kernel, wp=wp, hpwp=hpwp),
        out_shape=jax.ShapeDtypeStruct((n, hpwp, c), jnp.bfloat16),
        grid=(n, nb),
        in_specs=[pl.BlockSpec((1, hpwp + extra, 128), lambda ni, j: (ni, 0, j)),
                  pl.BlockSpec((1, 9, 128, 128), lambda ni, j: (j, 0, 0, 0))],
        out_specs=pl.BlockSpec((1, hpwp, 128), lambda ni, j: (ni, 0, j)),
        scratch_shapes=[pltpu.VMEM((hpwp, 128), jnp.float32)],
        compiler_params=pltpu.CompilerParams(
            dimension_semantics=("parallel", "parallel"),
            vmem_limit_bytes=64 * 1024 * 1024),
    )(x3, w_band)
    out4 = out.reshape(n, hp, wp, c)
    if stride == 1:
        oh, ow = h, w
        valid = out4[:, :h, :w, :]
    else:
        oh, ow = h // stride, w // stride
        valid = out4[:, 0:stride * oh:stride, 0:stride * ow:stride, :]
    # TODO(synk): fold the valid-region extraction into the next kernel's index_map.
    return valid.reshape(n * oh * ow, c), oh, ow


# ----------------------------- fused stats + pooling ---------------------------

def _stats_pool_kernel(x_ref, psum_ref, sum_ref, sq_ref):
    n_i = pl.program_id(1)
    t_i = pl.program_id(2)

    @pl.when(t_i == 0)
    def _init_psum():
        psum_ref[...] = jnp.zeros_like(psum_ref)

    @pl.when(jnp.logical_and(n_i == 0, t_i == 0))
    def _init_global():
        sum_ref[...] = jnp.zeros_like(sum_ref)
        sq_ref[...] = jnp.zeros_like(sq_ref)

    x = x_ref[0].astype(jnp.float32)                    # (thw, tc)
    s = jnp.sum(x, axis=0, keepdims=True)[None]         # (1, 1, tc)
    q = jnp.sum(x * x, axis=0, keepdims=True)[None]
    psum_ref[...] += s
    sum_ref[...] += s
    sq_ref[...] += q


def stats_and_pool(x_flat, n, hw, c, target=4 << 20):
    """One pass over (n*hw, c) bf16 -> global sum/sumsq (1,1,c) and per-sample sums (n,1,c)."""
    x3 = x_flat.reshape(n, hw, c)
    tc = c if c <= 512 else 512
    hwp, thw = _row_tile(hw, tc * 2, target)
    if hwp != hw:
        x3 = jnp.pad(x3, ((0, 0), (0, hwp - hw), (0, 0)))
    grid = (c // tc, n, hwp // thw)
    psum, ssum, ssq = pl.pallas_call(
        _stats_pool_kernel,
        out_shape=(jax.ShapeDtypeStruct((n, 1, c), jnp.float32),
                   jax.ShapeDtypeStruct((1, 1, c), jnp.float32),
                   jax.ShapeDtypeStruct((1, 1, c), jnp.float32)),
        grid=grid,
        in_specs=[pl.BlockSpec((1, thw, tc), lambda ci, ni, ti: (ni, ti, ci))],
        out_specs=(pl.BlockSpec((1, 1, tc), lambda ci, ni, ti: (ni, 0, ci)),
                   pl.BlockSpec((1, 1, tc), lambda ci, ni, ti: (0, 0, ci)),
                   pl.BlockSpec((1, 1, tc), lambda ci, ni, ti: (0, 0, ci))),
        compiler_params=pltpu.CompilerParams(
            dimension_semantics=("parallel", "arbitrary", "arbitrary")),
    )(x3)
    return ssum, ssq, psum


# ----------------------------- BatchNorm apply ----------------------------------

def _bn_apply_kernel(x_ref, sum_ref, sq_ref, g_ref, b_ref, o_ref,
                     *, inv_count, eps, relu):
    mean = sum_ref[...] * inv_count
    var = jnp.maximum(sq_ref[...] * inv_count - mean * mean, 0.0)
    scale = g_ref[...] * jax.lax.rsqrt(var + eps)
    bias = b_ref[...] - mean * scale
    y = x_ref[...].astype(jnp.float32) * scale + bias
    if relu:
        y = jnp.maximum(y, 0.0)
    o_ref[...] = y.astype(o_ref.dtype)


def bn_apply(x, ssum, ssq, g, b, relu, inv_count, eps=1e-5, target=4 << 20):
    M, C = x.shape
    Mp, tm = _row_tile(M, C * 2, target)
    xp = x if Mp == M else jnp.pad(x, ((0, Mp - M), (0, 0)))
    out = pl.pallas_call(
        functools.partial(_bn_apply_kernel, inv_count=inv_count, eps=eps, relu=relu),
        out_shape=jax.ShapeDtypeStruct((Mp, C), jnp.bfloat16),
        grid=(Mp // tm,),
        in_specs=[pl.BlockSpec((tm, C), lambda i: (i, 0)),
                  pl.BlockSpec((1, C), lambda i: (0, 0)),
                  pl.BlockSpec((1, C), lambda i: (0, 0)),
                  pl.BlockSpec((1, C), lambda i: (0, 0)),
                  pl.BlockSpec((1, C), lambda i: (0, 0))],
        out_specs=pl.BlockSpec((tm, C), lambda i: (i, 0)),
        compiler_params=pltpu.CompilerParams(dimension_semantics=("parallel",)),
    )(xp, ssum, ssq, g, b)
    return out if Mp == M else out[:M]


def batchnorm_flat(x, n, hw, c, g, b, relu, eps=1e-5):
    ssum, ssq, _ = stats_and_pool(x, n, hw, c)
    return bn_apply(x, ssum.reshape(1, c), ssq.reshape(1, c), g, b, relu,
                    inv_count=1.0 / (n * hw), eps=eps)


# ----------------------------- SE (bn3-folded) kernels ---------------------------

def _se_fc_kernel(p_ref, sum_ref, sq_ref, g_ref, b_ref,
                  w1_ref, b1_ref, w2_ref, b2_ref, o_ref, *, inv_count, eps):
    # bn3 affine on the pooled raw conv3 output, then fc1 -> ReLU -> fc2 -> sigmoid.
    mean = sum_ref[...] * inv_count
    var = jnp.maximum(sq_ref[...] * inv_count - mean * mean, 0.0)
    scale = g_ref[...] * jax.lax.rsqrt(var + eps)
    bias = b_ref[...] - mean * scale
    p = p_ref[...] * scale + bias
    h = jnp.dot(p.astype(jnp.bfloat16), w1_ref[...],
                preferred_element_type=jnp.float32) + b1_ref[...]
    h = jnp.maximum(h, 0.0)
    s = jnp.dot(h.astype(jnp.bfloat16), w2_ref[...],
                preferred_element_type=jnp.float32) + b2_ref[...]
    o_ref[...] = jax.nn.sigmoid(s)


def se_fc(pooled, ssum, ssq, g, b, w1, b1, w2, b2, inv_count, eps=1e-5):
    N, C = pooled.shape
    Rp = w1.shape[1]
    ch = C // 2                                   # 2-way parallel split of fc2 output
    out = pl.pallas_call(
        functools.partial(_se_fc_kernel, inv_count=inv_count, eps=eps),
        out_shape=jax.ShapeDtypeStruct((N, C), jnp.float32),
        grid=(2,),
        in_specs=[pl.BlockSpec((N, C), lambda j: (0, 0)),
                  pl.BlockSpec((1, C), lambda j: (0, 0)),
                  pl.BlockSpec((1, C), lambda j: (0, 0)),
                  pl.BlockSpec((1, C), lambda j: (0, 0)),
                  pl.BlockSpec((1, C), lambda j: (0, 0)),
                  pl.BlockSpec((C, Rp), lambda j: (0, 0)),
                  pl.BlockSpec((1, Rp), lambda j: (0, 0)),
                  pl.BlockSpec((Rp, ch), lambda j: (0, j)),
                  pl.BlockSpec((1, ch), lambda j: (0, j))],
        out_specs=pl.BlockSpec((N, ch), lambda j: (0, j)),
        compiler_params=pltpu.CompilerParams(dimension_semantics=("parallel",)),
    )(pooled, ssum.reshape(1, C), ssq.reshape(1, C), g, b, w1, b1, w2, b2)
    return out


def _bn_se_res_kernel(x_ref, s_ref, r_ref, sum_ref, sq_ref, g_ref, b_ref, o_ref,
                      *, inv_count, eps):
    mean = sum_ref[...] * inv_count
    var = jnp.maximum(sq_ref[...] * inv_count - mean * mean, 0.0)
    scale = g_ref[...] * jax.lax.rsqrt(var + eps)
    bias = b_ref[...] - mean * scale
    y = (x_ref[...].astype(jnp.float32) * scale + bias) * s_ref[...] \
        + r_ref[...].astype(jnp.float32)
    o_ref[...] = jnp.maximum(y, 0.0).astype(o_ref.dtype)


def bn_se_residual_relu(x, s, r, ssum, ssq, g, b, n, hw, c, inv_count,
                        eps=1e-5, target=4 << 20):
    # relu( bn3(x) * se_scale + residual ) -> bf16
    x3 = x.reshape(n, hw, c)
    r3 = r.reshape(n, hw, c)
    hwp, thw = _row_tile(hw, c * 2, target)
    if hwp != hw:
        x3 = jnp.pad(x3, ((0, 0), (0, hwp - hw), (0, 0)))
        r3 = jnp.pad(r3, ((0, 0), (0, hwp - hw), (0, 0)))
    s3 = s.reshape(n, 1, c)
    c1 = lambda a: a.reshape(1, 1, c)
    out = pl.pallas_call(
        functools.partial(_bn_se_res_kernel, inv_count=inv_count, eps=eps),
        out_shape=jax.ShapeDtypeStruct((n, hwp, c), jnp.bfloat16),
        grid=(n, hwp // thw),
        in_specs=[pl.BlockSpec((1, thw, c), lambda ni, ti: (ni, ti, 0)),
                  pl.BlockSpec((1, 1, c), lambda ni, ti: (ni, 0, 0)),
                  pl.BlockSpec((1, thw, c), lambda ni, ti: (ni, ti, 0)),
                  pl.BlockSpec((1, 1, c), lambda ni, ti: (0, 0, 0)),
                  pl.BlockSpec((1, 1, c), lambda ni, ti: (0, 0, 0)),
                  pl.BlockSpec((1, 1, c), lambda ni, ti: (0, 0, 0)),
                  pl.BlockSpec((1, 1, c), lambda ni, ti: (0, 0, 0))],
        out_specs=pl.BlockSpec((1, thw, c), lambda ni, ti: (ni, ti, 0)),
        compiler_params=pltpu.CompilerParams(
            dimension_semantics=("parallel", "parallel"),
            vmem_limit_bytes=64 * 1024 * 1024),
    )(x3, s3, r3, c1(ssum), c1(ssq), c1(g), c1(b))
    if hwp != hw:
        out = out[:, :hw]
    return out.reshape(n * hw, c)


# ----------------------------- classifier head + BCE ---------------------------

def _head_bce_kernel(x_ref, w_ref, b_ref, y_ref, out_ref, loss_ref, *, inv_n):
    z = jnp.dot(x_ref[...].astype(jnp.bfloat16), w_ref[...],
                preferred_element_type=jnp.float32) + b_ref[...]
    out_ref[...] = z
    y = y_ref[...]
    per = jnp.maximum(z, 0.0) - z * y + jnp.log1p(jnp.exp(-jnp.abs(z)))
    loss_ref[...] = jnp.sum(per, keepdims=True).reshape(1, 1) * inv_n


def head_with_bce(pooled, w, b, targets):
    # pooled: (N, 2048) f32; w: (2048, 1) bf16; b: (1, 1) f32; targets: (N,)
    # TODO(synk): head kept single-program (negligible work; would need a second tiny
    # combine kernel to give v7x's second core anything useful to do).
    N, C = pooled.shape
    y = targets.reshape(N, 1).astype(jnp.float32)
    out, loss = pl.pallas_call(
        functools.partial(_head_bce_kernel, inv_n=1.0 / N),
        out_shape=(jax.ShapeDtypeStruct((N, 1), jnp.float32),
                   jax.ShapeDtypeStruct((1, 1), jnp.float32)),
        grid=(1,),
        in_specs=[pl.BlockSpec((N, C), lambda i: (0, 0)),
                  pl.BlockSpec((C, 1), lambda i: (0, 0)),
                  pl.BlockSpec((1, 1), lambda i: (0, 0)),
                  pl.BlockSpec((N, 1), lambda i: (0, 0))],
        out_specs=(pl.BlockSpec((N, 1), lambda i: (0, 0)),
                   pl.BlockSpec((1, 1), lambda i: (0, 0))),
    )(pooled.astype(jnp.float32), w, b, y)
    return out, loss[0, 0]


# ----------------------------- stem helpers ------------------------------------

def _im2col(x, kh, kw, stride, padding):
    # Used ONLY for the 7x7 stem conv (Cin=3); every other conv is a fused Pallas kernel.
    # TODO(synk): replace with space-to-depth so the stem reduction dim is lane-dense.
    N, H, W, C = x.shape
    if padding > 0:
        x = jnp.pad(x, ((0, 0), (padding, padding), (padding, padding), (0, 0)))
    Hp, Wp = H + 2 * padding, W + 2 * padding
    OH = (Hp - kh) // stride + 1
    OW = (Wp - kw) // stride + 1
    cols = []
    for i in range(kh):
        for j in range(kw):
            cols.append(x[:, i:i + stride * OH:stride, j:j + stride * OW:stride, :])
    cols = jnp.stack(cols, axis=3)                        # (N, OH, OW, kh*kw, C)
    return cols.reshape(N * OH * OW, kh * kw * C), OH, OW


def max_pool_3x3_s2_ceil(x):
    # TODO(synk): stem-only, tiny op, kept as jax.lax.reduce_window.
    N, H, W, C = x.shape
    OH = -(-(H - 3) // 2) + 1
    OW = -(-(W - 3) // 2) + 1
    ph = max(0, (OH - 1) * 2 + 3 - H)
    pw = max(0, (OW - 1) * 2 + 3 - W)
    neg = jnp.array(-jnp.inf, x.dtype)
    xp = jnp.pad(x, ((0, 0), (0, ph), (0, pw), (0, 0)), constant_values=neg)
    return jax.lax.reduce_window(xp, neg, jax.lax.max,
                                 (1, 3, 3, 1), (1, 2, 2, 1), "VALID")


# ----------------------------- SE-ResNeXt bottleneck ----------------------------

def bottleneck(x, n, h, w, cin, p, eps=1e-5):
    stride = p["stride"]
    width, cout = p["width"], p["cout"]
    h1 = matmul_bf16(x, p["w1"])                                     # conv1 1x1
    h1 = batchnorm_flat(h1, n, h * w, width, p["bn1_g"], p["bn1_b"], True, eps)
    h2, oh, ow = grouped_conv3x3(h1, n, h, w, width, p["w2_band"], stride)
    h2 = batchnorm_flat(h2, n, oh * ow, width, p["bn2_g"], p["bn2_b"], True, eps)
    h3 = matmul_bf16(h2, p["w3"])                                    # conv3 1x1 (bn3 fused later)
    if "wd" in p:
        xr = x
        if stride > 1:
            # TODO(synk): fold the stride-2 subsample into the downsample matmul's lhs index_map.
            xr = x.reshape(n, h, w, cin)[:, ::stride, ::stride, :].reshape(n * oh * ow, cin)
        r = matmul_bf16(xr, p["wd"])
        r = batchnorm_flat(r, n, oh * ow, cout, p["bnd_g"], p["bnd_b"], False, eps)
    else:
        r = x
    m = n * oh * ow
    ssum, ssq, psum = stats_and_pool(h3, n, oh * ow, cout)           # one pass: BN stats + GAP
    pooled_raw = psum.reshape(n, cout) * (1.0 / (oh * ow))
    s = se_fc(pooled_raw, ssum, ssq, p["bn3_g"], p["bn3_b"],
              p["fc1_w"], p["fc1_b"], p["fc2_w"], p["fc2_b"],
              inv_count=1.0 / m, eps=eps)
    out = bn_se_residual_relu(h3, s, r, ssum, ssq, p["bn3_g"], p["bn3_b"],
                              n, oh * ow, cout, inv_count=1.0 / m, eps=eps)
    return out, oh, ow, cout


# ----------------------------- parameters ---------------------------------------

def _conv_init(key, cout, cin, kh, kw):
    fan_in = cin * kh * kw
    return jax.random.normal(key, (cout, cin, kh, kw), jnp.float32) * float(1.0 / np.sqrt(fan_in))


def init_params(key):
    """PyTorch-layout random weights for SEResNext50_32x4d + Linear(2048,1)."""
    keys = iter(jax.random.split(key, 512))
    params = {}
    params["layer0"] = {
        "conv_w": _conv_init(next(keys), 64, 3, 7, 7),
        "bn_g": jnp.ones((64,), jnp.float32),
        "bn_b": jnp.zeros((64,), jnp.float32),
    }
    cfg = [(64, 3, 1), (128, 4, 2), (256, 6, 2), (512, 3, 2)]
    groups, base_width, red = 32, 4, 16
    inplanes = 64
    layers = []
    for planes, n_blocks, stride in cfg:
        width = (planes * base_width // 64) * groups
        outplanes = planes * 4
        blocks = []
        for b in range(n_blocks):
            s = stride if b == 0 else 1
            bp = {
                "stride": s,
                "conv1_w": _conv_init(next(keys), width, inplanes, 1, 1),
                "bn1_g": jnp.ones((width,), jnp.float32),
                "bn1_b": jnp.zeros((width,), jnp.float32),
                "conv2_w": _conv_init(next(keys), width, width // groups, 3, 3),
                "bn2_g": jnp.ones((width,), jnp.float32),
                "bn2_b": jnp.zeros((width,), jnp.float32),
                "conv3_w": _conv_init(next(keys), outplanes, width, 1, 1),
                "bn3_g": jnp.ones((outplanes,), jnp.float32),
                "bn3_b": jnp.zeros((outplanes,), jnp.float32),
                "fc1_w": jax.random.normal(next(keys), (outplanes, outplanes // red), jnp.float32)
                * float(1.0 / np.sqrt(outplanes)),
                "fc1_b": jnp.zeros((outplanes // red,), jnp.float32),
                "fc2_w": jax.random.normal(next(keys), (outplanes // red, outplanes), jnp.float32)
                * float(1.0 / np.sqrt(outplanes // red)),
                "fc2_b": jnp.zeros((outplanes,), jnp.float32),
            }
            if b == 0:
                bp["down_w"] = _conv_init(next(keys), outplanes, inplanes, 1, 1)
                bp["down_g"] = jnp.ones((outplanes,), jnp.float32)
                bp["down_b"] = jnp.zeros((outplanes,), jnp.float32)
            blocks.append(bp)
            inplanes = outplanes
        layers.append(blocks)
    params["layers"] = layers
    params["out_w"] = jax.random.normal(next(keys), (1, 2048), jnp.float32) * float(1.0 / np.sqrt(2048))
    params["out_b"] = jax.random.normal(next(keys), (1,), jnp.float32) * 0.01
    return params


def _banded_grouped_weight(w, groups=32, band=128):
    """(Cout, Cg, 3, 3) grouped weight -> (Nb, 9, 128, 128) per-band dense bf16 weight."""
    cout, cg, kh, kw = w.shape
    cog = cout // groups
    nb = cout // band
    gpb = band // cog                                     # groups per 128-channel band
    wg = w.reshape(groups, cog, cg, kh, kw)
    wg = jnp.transpose(wg, (0, 2, 1, 3, 4))               # (groups, cg, cog, kh, kw)
    wg = wg.reshape(nb, gpb, cg, cog, kh, kw)
    eye = jnp.eye(gpb, dtype=w.dtype)
    wb = jnp.einsum("gh,ngcokl->ngchokl", eye, wg)        # block-diag within each band
    wb = wb.reshape(nb, band, band, kh, kw)
    wb = jnp.transpose(wb, (0, 3, 4, 1, 2)).reshape(nb, kh * kw, band, band)
    return wb.astype(jnp.bfloat16)


def prepare_params(params):
    """One-time conversion of PyTorch-layout weights into kernel-ready layouts."""
    p0 = params["layer0"]
    prep = {"layer0": {
        "conv_w": jnp.transpose(p0["conv_w"], (2, 3, 1, 0)).reshape(7 * 7 * 3, 64).astype(jnp.bfloat16),
        "bn_g": p0["bn_g"].reshape(1, 64).astype(jnp.float32),
        "bn_b": p0["bn_b"].reshape(1, 64).astype(jnp.float32),
    }}
    layers = []
    for blocks in params["layers"]:
        pblocks = []
        for bp in blocks:
            width, cin = bp["conv1_w"].shape[0], bp["conv1_w"].shape[1]
            cout = bp["conv3_w"].shape[0]
            r = bp["fc1_w"].shape[1]
            d = {
                "stride": bp["stride"], "width": width, "cout": cout,
                "w1": jnp.transpose(bp["conv1_w"].reshape(width, cin)).astype(jnp.bfloat16),
                "bn1_g": bp["bn1_g"].reshape(1, width).astype(jnp.float32),
                "bn1_b": bp["bn1_b"].reshape(1, width).astype(jnp.float32),
                "w2_band": _banded_grouped_weight(bp["conv2_w"]),
                "bn2_g": bp["bn2_g"].reshape(1, width).astype(jnp.float32),
                "bn2_b": bp["bn2_b"].reshape(1, width).astype(jnp.float32),
                "w3": jnp.transpose(bp["conv3_w"].reshape(cout, width)).astype(jnp.bfloat16),
                "bn3_g": bp["bn3_g"].reshape(1, cout).astype(jnp.float32),
                "bn3_b": bp["bn3_b"].reshape(1, cout).astype(jnp.float32),
                "fc1_w": jnp.pad(bp["fc1_w"], ((0, 0), (0, 128 - r))).astype(jnp.bfloat16),
                "fc1_b": jnp.pad(bp["fc1_b"].reshape(1, r), ((0, 0), (0, 128 - r))).astype(jnp.float32),
                "fc2_w": jnp.pad(bp["fc2_w"], ((0, 128 - r), (0, 0))).astype(jnp.bfloat16),
                "fc2_b": bp["fc2_b"].reshape(1, cout).astype(jnp.float32),
            }
            if "down_w" in bp:
                d["wd"] = jnp.transpose(bp["down_w"].reshape(cout, cin)).astype(jnp.bfloat16)
                d["bnd_g"] = bp["down_g"].reshape(1, cout).astype(jnp.float32)
                d["bnd_b"] = bp["down_b"].reshape(1, cout).astype(jnp.float32)
            pblocks.append(d)
        layers.append(pblocks)
    prep["layers"] = layers
    prep["out_w"] = jnp.transpose(params["out_w"]).astype(jnp.bfloat16)   # (2048, 1)
    prep["out_b"] = params["out_b"].reshape(1, 1).astype(jnp.float32)
    return prep


# ----------------------------- forward -------------------------------------------

def forward(params, image_nchw, targets, eps=1e-5):
    # image_nchw: (bs, 3, H, W) like PyTorch; targets: (bs,)
    x = jnp.transpose(image_nchw.astype(jnp.float32), (0, 2, 3, 1)).astype(jnp.bfloat16)
    n = x.shape[0]
    p0 = params["layer0"]
    lhs, oh, ow = _im2col(x, 7, 7, 2, 3)                  # stem 7x7 s2 p3 (one-time im2col)
    h = matmul_bf16(lhs, p0["conv_w"])                    # (n*oh*ow, 64) bf16
    h = batchnorm_flat(h, n, oh * ow, 64, p0["bn_g"], p0["bn_b"], relu=True, eps=eps)
    x4 = max_pool_3x3_s2_ceil(h.reshape(n, oh, ow, 64))
    _, H, W, C = x4.shape
    x = x4.reshape(n * H * W, C)
    for blocks in params["layers"]:
        for bp in blocks:
            x, H, W, C = bottleneck(x, n, H, W, C, bp, eps=eps)
    _, _, psum = stats_and_pool(x, n, H * W, C)           # adaptive_avg_pool2d(1)
    pooled = psum.reshape(n, C) * (1.0 / (H * W))
    out, loss = head_with_bce(pooled, params["out_w"], params["out_b"], targets)
    return out, loss


if __name__ == "__main__":
    key = jax.random.PRNGKey(0)
    pkey, ikey, tkey = jax.random.split(key, 3)
    params = prepare_params(init_params(pkey))
    image = jax.random.normal(ikey, (2, 3, 32, 32), jnp.float32)
    targets = (jax.random.uniform(tkey, (2,)) > 0.5).astype(jnp.float32)

    out, loss = forward(params, image, targets)
    out = jax.block_until_ready(out)
    loss = jax.block_until_ready(loss)

    assert out.shape == (2, 1)
    assert bool(jnp.isfinite(loss)) and bool(jnp.all(jnp.isfinite(out)))
    print("KERNEL_OK")
</pallas_src>

<mosaic_0001>
module attributes {stable_mosaic.version = 11 : i64} {
  func.func @_mm_kernel(%arg0: i32, %arg1: i32, %arg2: i32, %arg3: memref<512x147xbf16, #tpu.memory_space<vmem>>, %arg4: memref<147x64xbf16, #tpu.memory_space<vmem>>, %arg5: memref<512x64xbf16, #tpu.memory_space<vmem>>, %arg6: memref<512x64xf32, #tpu.memory_space<vmem>>) attributes {dimension_semantics = [#tpu.dimension_semantics<parallel>, #tpu.dimension_semantics<parallel>, #tpu.dimension_semantics<arbitrary>], iteration_bounds = array<i64: 1, 1, 1>, scalar_prefetch = 0 : i64, scratch_operands = 1 : i64, tpu.core_type = #tpu.core_type<tc>, window_params = [{transform_indices = @transform_0, window_bounds = array<i64: 512, 147>}, {transform_indices = @transform_1, window_bounds = array<i64: 147, 64>}, {transform_indices = @transform_2, window_bounds = array<i64: 512, 64>}]} {
    %c0_i32 = arith.constant 0 : i32
    %0 = arith.cmpi eq, %arg2, %c0_i32 : i32
    %1 = arith.extui %0 : i1 to i32
    %c0_i32_0 = arith.constant 0 : i32
    %2 = arith.cmpi ne, %1, %c0_i32_0 : i32
    scf.if %2 {
      %cst_10 = arith.constant 0.000000e+00 : f32
      %12 = vector.broadcast %cst_10 : f32 to vector<512x64xf32>
      %c0_11 = arith.constant 0 : index
      %c0_12 = arith.constant 0 : index
      %13 = vector.load %arg6[%c0_11, %c0_12] : memref<512x64xf32, #tpu.memory_space<vmem>>, vector<512x64xf32>
      tpu.vector_store %arg6[%c0_11, %c0_12], %12 {strides = array<i32>} : memref<512x64xf32, #tpu.memory_space<vmem>>, vector<512x64xf32>,
    } else {
    }
    %c0 = arith.constant 0 : index
    %c0_1 = arith.constant 0 : index
    %3 = vector.load %arg6[%c0, %c0_1] : memref<512x64xf32, #tpu.memory_space<vmem>>, vector<512x64xf32>
    %c0_2 = arith.constant 0 : index
    %c0_3 = arith.constant 0 : index
    %4 = vector.load %arg3[%c0_2, %c0_3] : memref<512x147xbf16, #tpu.memory_space<vmem>>, vector<512x147xbf16>
    %c0_4 = arith.constant 0 : index
    %c0_5 = arith.constant 0 : index
    %5 = vector.load %arg4[%c0_4, %c0_5] : memref<147x64xbf16, #tpu.memory_space<vmem>>, vector<147x64xbf16>
    %cst = arith.constant dense<0.000000e+00> : vector<512x64xf32>
    %6 = tpu.matmul %4, %5, %cst {dimension_numbers = #tpu.dot_dimension_numbers<[1], [0], [0], [1], [0, 0, 1, 1], [], []>} : vector<512x147xbf16>, vector<147x64xbf16>, vector<512x64xf32> -> vector<512x64xf32>
    %7 = arith.addf %3, %6 : vector<512x64xf32>
    %c0_6 = arith.constant 0 : index
    %c0_7 = arith.constant 0 : index
    %8 = vector.load %arg6[%c0_6, %c0_7] : memref<512x64xf32, #tpu.memory_space<vmem>>, vector<512x64xf32>
    tpu.vector_store %arg6[%c0_6, %c0_7], %7 {strides = array<i32>} : memref<512x64xf32, #tpu.memory_space<vmem>>, vector<512x64xf32>,
    %c0_i32_8 = arith.constant 0 : i32
    %9 = arith.cmpi eq, %arg2, %c0_i32_8 : i32
    %10 = arith.extui %9 : i1 to i32
    %c0_i32_9 = arith.constant 0 : i32
    %11 = arith.cmpi ne, %10, %c0_i32_9 : i32
    scf.if %11 {
      %c0_10 = arith.constant 0 : index
      %c0_11 = arith.constant 0 : index
      %12 = vector.load %arg6[%c0_10, %c0_11] : memref<512x64xf32, #tpu.memory_space<vmem>>, vector<512x64xf32>
      %13 = arith.truncf %12 : vector<512x64xf32> to vector<512x64xbf16>
      %c0_12 = arith.constant 0 : index
      %c0_13 = arith.constant 0 : index
      %14 = vector.load %arg5[%c0_12, %c0_13] : memref<512x64xbf16, #tpu.memory_space<vmem>>, vector<512x64xbf16>
      tpu.vector_store %arg5[%c0_12, %c0_13], %13 {strides = array<i32>} : memref<512x64xbf16, #tpu.memory_space<vmem>>, vector<512x64xbf16>,
    } else {
    }
    return
  }
  func.func @transform_0(%arg0: i32, %arg1: i32, %arg2: i32) -> (i32, i32) {
    %c0_i32 = arith.constant 0 : i32
    return %arg0, %arg2 : i32, i32
  }
  func.func @transform_1(%arg0: i32, %arg1: i32, %arg2: i32) -> (i32, i32) {
    %c0_i32 = arith.constant 0 : i32
    return %arg2, %arg1 : i32, i32
  }
  func.func @transform_2(%arg0: i32, %arg1: i32, %arg2: i32) -> (i32, i32) {
    %c0_i32 = arith.constant 0 : i32
    return %arg0, %arg1 : i32, i32
  }
}

</mosaic_0001>

<llo_original>
// kernel: tpu_custom_call.1
$region0: #{tpu_custom_call.1}
  #allocation0 [shape = 'u32[]', space=smem, size = 0x4, offset = 0x4, fixed_abs, tag = 'smem constant byte address 0x4 - core index']
  #allocation1 [shape = 'u32[72,128]{1,0:T(1,128)}', space=vmem, size = 0x9000, scoped, tag = 'internal scratch']
  #allocation2 [shape = 'f32[512,64]{1,0:T(8,128)}', space=vmem, size = 0x40000, scoped, tag = 'scratch operand']
  %s0 = inlined_call_operand.vmem [shape: bf16[512,147], index: 0, kind: input, shape index: {}]
  %s1 = inlined_call_operand.vmem [shape: bf16[147,64], index: 1, kind: input, shape index: {}]
  %s2 = inlined_call_operand.vmem [shape: bf16[512,64], index: 2, kind: output, shape index: {}]
  %s3 = sld [smem:[#allocation0]]
  $region26: #{tpu_custom_call.1} parent=0
    _
  %s5 = ssub.s32 1, %s3
  %s6 = scalar_select 0, %s5, %s3
  // Predicated region
  $region2: #{tpu_custom_call.1} parent=0 // pred_check
    _
  $region3: #{tpu_custom_call.1} parent=0 // pred_check_branch
    %8 = sbr.rel (0) target = $region5
  $region4: #{tpu_custom_call.1} parent=0 // pred_region
    _
  $region5: #{tpu_custom_call.1} parent=0 // pred_fallthru
    _
  // Predicated region
  $region6: #{tpu_custom_call.1} parent=0 // pred_check
    _
  $region7: #{tpu_custom_call.1} parent=0 // pred_check_branch
    %10 = sbr.rel (0) target = $region9
  $region8: #{tpu_custom_call.1} parent=0 // pred_region
    _
  $region9: #{tpu_custom_call.1} parent=0 // pred_fallthru
    _
  %p12 = scmp.eq.s32.totalorder 0, 0
  // Predicated region
  $region10: #{tpu_custom_call.1} parent=0 // pred_check
    %p13 = pneg %p12
  $region11: #{tpu_custom_call.1} parent=0 // pred_check_branch
    %15 = sbr.rel (%p13) target = $region13
  $region12: #{tpu_custom_call.1} parent=0 // pred_region
    %vm16 = vcmask 523264
    %17 = vst.msk [vmem:[#allocation2] sm:$0xff] %vm16, 0.0
    %18 = vst.msk [vmem:[#allocation2 + $0x8] sm:$0xff] %vm16, 0.0
    %19 = vst.msk [vmem:[#allocation2 + $0x10] sm:$0xff] %vm16, 0.0
    %20 = vst.msk [vmem:[#allocation2 + $0x18] sm:$0xff] %vm16, 0.0
    %21 = vst.msk [vmem:[#allocation2 + $0x20] sm:$0xff] %vm16, 0.0
    %22 = vst.msk [vmem:[#allocation2 + $0x28] sm:$0xff] %vm16, 0.0
    %23 = vst.msk [vmem:[#allocation2 + $0x30] sm:$0xff] %vm16, 0.0
    %24 = vst.msk [vmem:[#allocation2 + $0x38] sm:$0xff] %vm16, 0.0
    %25 = vst.msk [vmem:[#allocation2 + $0x40] sm:$0xff] %vm16, 0.0
    %26 = vst.msk [vmem:[#allocation2 + $0x48] sm:$0xff] %vm16, 0.0
    %27 = vst.msk [vmem:[#allocation2 + $0x50] sm:$0xff] %vm16, 0.0
    %28 = vst.msk [vmem:[#allocation2 + $0x58] sm:$0xff] %vm16, 0.0
    %29 = vst.msk [vmem:[#allocation2 + $0x60] sm:$0xff] %vm16, 0.0
    %30 = vst.msk [vmem:[#allocation2 + $0x68] sm:$0xff] %vm16, 0.0
    %31 = vst.msk [vmem:[#allocation2 + $0x70] sm:$0xff] %vm16, 0.0
    %32 = vst.msk [vmem:[#allocation2 + $0x78] sm:$0xff] %vm16, 0.0
    %33 = vst.msk [vmem:[#allocation2 + $0x80] sm:$0xff] %vm16, 0.0
    %34 = vst.msk [vmem:[#allocation2 + $0x88] sm:$0xff] %vm16, 0.0
    %35 = vst.msk [vmem:[#allocation2 + $0x90] sm:$0xff] %vm16, 0.0
    %36 = vst.msk [vmem:[#allocation2 + $0x98] sm:$0xff] %vm16, 0.0
    %37 = vst.msk [vmem:[#allocation2 + $0xa0] sm:$0xff] %vm16, 0.0
    %38 = vst.msk [vmem:[#allocation2 + $0xa8] sm:$0xff] %vm16, 0.0
    %39 = vst.msk [vmem:[#allocation2 + $0xb0] sm:$0xff] %vm16, 0.0
    %40 = vst.msk [vmem:[#allocation2 + $0xb8] sm:$0xff] %vm16, 0.0
    %41 = vst.msk [vmem:[#allocation2 + $0xc0] sm:$0xff] %vm16, 0.0
    %42 = vst.msk [vmem:[#allocation2 + $0xc8] sm:$0xff] %vm16, 0.0
    %43 = vst.msk [vmem:[#allocation2 + $0xd0] sm:$0xff] %vm16, 0.0
    %44 = vst.msk [vmem:[#allocation2 + $0xd8] sm:$0xff] %vm16, 0.0
    %45 = vst.msk [vmem:[#allocation2 + $0xe0] sm:$0xff] %vm16, 0.0
    %46 = vst.msk [vmem:[#allocation2 + $0xe8] sm:$0xff] %vm16, 0.0
    %47 = vst.msk [vmem:[#allocation2 + $0xf0] sm:$0xff] %vm16, 0.0
    %48 = vst.msk [vmem:[#allocation2 + $0xf8] sm:$0xff] %vm16, 0.0
    %49 = vst.msk [vmem:[#allocation2 + $0x100] sm:$0xff] %vm16, 0.0
    %50 = vst.msk [vmem:[#allocation2 + $0x108] sm:$0xff] %vm16, 0.0
    %51 = vst.msk [vmem:[#allocation2 + $0x110] sm:$0xff] %vm16, 0.0
    %52 = vst.msk [vmem:[#allocation2 + $0x118] sm:$0xff] %vm16, 0.0
    %53 = vst.msk [vmem:[#allocation2 + $0x120] sm:$0xff] %vm16, 0.0
    %54 = vst.msk [vmem:[#allocation2 + $0x128] sm:$0xff] %vm16, 0.0
    %55 = vst.msk [vmem:[#allocation2 + $0x130] sm:$0xff] %vm16, 0.0
    %56 = vst.msk [vmem:[#allocation2 + $0x138] sm:$0xff] %vm16, 0.0
    %57 = vst.msk [vmem:[#allocation2 + $0x140] sm:$0xff] %vm16, 0.0
    %58 = vst.msk [vmem:[#allocation2 + $0x148] sm:$0xff] %vm16, 0.0
    %59 = vst.msk [vmem:[#allocation2 + $0x150] sm:$0xff] %vm16, 0.0
    %60 = vst.msk [vmem:[#allocation2 + $0x158] sm:$0xff] %vm16, 0.0
    %61 = vst.msk [vmem:[#allocation2 + $0x160] sm:$0xff] %vm16, 0.0
    %62 = vst.msk [vmem:[#allocation2 + $0x168] sm:$0xff] %vm16, 0.0
    %63 = vst.msk [vmem:[#allocation2 + $0x170] sm:$0xff] %vm16, 0.0
    %64 = vst.msk [vmem:[#allocation2 + $0x178] sm:$0xff] %vm16, 0.0
    %65 = vst.msk [vmem:[#allocation2 + $0x180] sm:$0xff] %vm16, 0.0
    %66 = vst.msk [vmem:[#allocation2 + $0x188] sm:$0xff] %vm16, 0.0
    %67 = vst.msk [vmem:[#allocation2 + $0x190] sm:$0xff] %vm16, 0.0
    %68 = vst.msk [vmem:[#allocation2 + $0x198] sm:$0xff] %vm16, 0.0
    %69 = vst.msk [vmem:[#allocation2 + $0x1a0] sm:$0xff] %vm16, 0.0
    %70 = vst.msk [vmem:[#allocation2 + $0x1a8] sm:$0xff] %vm16, 0.0
    %71 = vst.msk [vmem:[#allocation2 + $0x1b0] sm:$0xff] %vm16, 0.0
    %72 = vst.msk [vmem:[#allocation2 + $0x1b8] sm:$0xff] %vm16, 0.0
    %73 = vst.msk [vmem:[#allocation2 + $0x1c0] sm:$0xff] %vm16, 0.0
    %74 = vst.msk [vmem:[#allocation2 + $0x1c8] sm:$0xff] %vm16, 0.0
    %75 = vst.msk [vmem:[#allocation2 + $0x1d0] sm:$0xff] %vm16, 0.0
    %76 = vst.msk [vmem:[#allocation2 + $0x1d8] sm:$0xff] %vm16, 0.0
    %77 = vst.msk [vmem:[#allocation2 + $0x1e0] sm:$0xff] %vm16, 0.0
    %78 = vst.msk [vmem:[#allocation2 + $0x1e8] sm:$0xff] %vm16, 0.0
    %79 = vst.msk [vmem:[#allocation2 + $0x1f0] sm:$0xff] %vm16, 0.0
    %80 = vst.msk [vmem:[#allocation2 + $0x1f8] sm:$0xff] %vm16, 0.0
  $region13: #{tpu_custom_call.1} parent=0 // pred_fallthru
    _
  %v81 = vld [vmem:[#allocation2] sm:$0xff]
  %v82 = vld [vmem:[#allocation2 + $0x8] sm:$0xff]
  %v83 = vld [vmem:[#allocation2 + $0x10] sm:$0xff]
  %v84 = vld [vmem:[#allocation2 + $0x18] sm:$0xff]
  %v85 = vld [vmem:[#allocation2 + $0x20] sm:$0xff]
  %v86 = vld [vmem:[#allocation2 + $0x28] sm:$0xff]
  %v87 = vld [vmem:[#allocation2 + $0x30] sm:$0xff]
  %v88 = vld [vmem:[#allocation2 + $0x38] sm:$0xff]
  %v89 = vld [vmem:[#allocation2 + $0x40] sm:$0xff]
  %v90 = vld [vmem:[#allocation2 + $0x48] sm:$0xff]
  %v91 = vld [vmem:[#allocation2 + $0x50] sm:$0xff]
  %v92 = vld [vmem:[#allocation2 + $0x58] sm:$0xff]
  %v93 = vld [vmem:[#allocation2 + $0x60] sm:$0xff]
  %v94 = vld [vmem:[#allocation2 + $0x68] sm:$0xff]
  %v95 = vld [vmem:[#allocation2 + $0x70] sm:$0xff]
  %v96 = vld [vmem:[#allocation2 + $0x78] sm:$0xff]
  %v97 = vld [vmem:[#allocation2 + $0x80] sm:$0xff]
  %v98 = vld [vmem:[#allocation2 + $0x88] sm:$0xff]
  %v99 = vld [vmem:[#allocation2 + $0x90] sm:$0xff]
  %v100 = vld [vmem:[#allocation2 + $0x98] sm:$0xff]
  %v101 = vld [vmem:[#allocation2 + $0xa0] sm:$0xff]
  %v102 = vld [vmem:[#allocation2 + $0xa8] sm:$0xff]
  %v103 = vld [vmem:[#allocation2 + $0xb0] sm:$0xff]
  %v104 = vld [vmem:[#allocation2 + $0xb8] sm:$0xff]
  %v105 = vld [vmem:[#allocation2 + $0xc0] sm:$0xff]
  %v106 = vld [vmem:[#allocation2 + $0xc8] sm:$0xff]
  %v107 = vld [vmem:[#allocation2 + $0xd0] sm:$0xff]
  %v108 = vld [vmem:[#allocation2 + $0xd8] sm:$0xff]
  %v109 = vld [vmem:[#allocation2 + $0xe0] sm:$0xff]
  %v110 = vld [vmem:[#allocation2 + $0xe8] sm:$0xff]
  %v111 = vld [vmem:[#allocation2 + $0xf0] sm:$0xff]
  %v112 = vld [vmem:[#allocation2 + $0xf8] sm:$0xff]
  %v113 = vld [vmem:[#allocation2 + $0x100] sm:$0xff]
  %v114 = vld [vmem:[#allocation2 + $0x108] sm:$0xff]
  %v115 = vld [vmem:[#allocation2 + $0x110] sm:$0xff]
  %v116 = vld [vmem:[#allocation2 + $0x118] sm:$0xff]
  %v117 = vld [vmem:[#allocation2 + $0x120] sm:$0xff]
  %v118 = vld [vmem:[#allocation2 + $0x128] sm:$0xff]
  %v119 = vld [vmem:[#allocation2 + $0x130] sm:$0xff]
  %v120 = vld [vmem:[#allocation2 + $0x138] sm:$0xff]
  %v121 = vld [vmem:[#allocation2 + $0x140] sm:$0xff]
  %v122 = vld [vmem:[#allocation2 + $0x148] sm:$0xff]
  %v123 = vld [vmem:[#allocation2 + $0x150] sm:$0xff]
  %v124 = vld [vmem:[#allocation2 + $0x158] sm:$0xff]
  %v125 = vld [vmem:[#allocation2 + $0x160] sm:$0xff]
  %v126 = vld [vmem:[#allocation2 + $0x168] sm:$0xff]
  %v127 = vld [vmem:[#allocation2 + $0x170] sm:$0xff]
  %v128 = vld [vmem:[#allocation2 + $0x178] sm:$0xff]
  %v129 = vld [vmem:[#allocation2 + $0x180] sm:$0xff]
  %v130 = vld [vmem:[#allocation2 + $0x188] sm:$0xff]
  %v131 = vld [vmem:[#allocation2 + $0x190] sm:$0xff]
  %v132 = vld [vmem:[#allocation2 + $0x198] sm:$0xff]
  %v133 = vld [vmem:[#allocation2 + $0x1a0] sm:$0xff]
  %v134 = vld [vmem:[#allocation2 + $0x1a8] sm:$0xff]
  %v135 = vld [vmem:[#allocation2 + $0x1b0] sm:$0xff]
  %v136 = vld [vmem:[#allocation2 + $0x1b8] sm:$0xff]
  %v137 = vld [vmem:[#allocation2 + $0x1c0] sm:$0xff]
  %v138 = vld [vmem:[#allocation2 + $0x1c8] sm:$0xff]
  %v139 = vld [vmem:[#allocation2 + $0x1d0] sm:$0xff]
  %v140 = vld [vmem:[#allocation2 + $0x1d8] sm:$0xff]
  %v141 = vld [vmem:[#allocation2 + $0x1e0] sm:$0xff]
  %v142 = vld [vmem:[#allocation2 + $0x1e8] sm:$0xff]
  %v143 = vld [vmem:[#allocation2 + $0x1f0] sm:$0xff]
  %v144 = vld [vmem:[#allocation2 + $0x1f8] sm:$0xff]
  %v145 = vld [vmem:[%s0] sm:$0xff]
  %v146 = vld [vmem:[%s0 + $0x8] sm:$0xff]
  %v147 = vld [vmem:[%s0 + $0x10] sm:$0xff]
  %v148 = vld [vmem:[%s0 + $0x18] sm:$0xff]
  %v149 = vld [vmem:[%s0 + $0x20] sm:$0xff]
  %v150 = vld [vmem:[%s0 + $0x28] sm:$0xff]
  %v151 = vld [vmem:[%s0 + $0x30] sm:$0xff]
  %v152 = vld [vmem:[%s0 + $0x38] sm:$0xff]
  %v153 = vld [vmem:[%s0 + $0x40] sm:$0xff]
  %v154 = vld [vmem:[%s0 + $0x48] sm:$0xff]
  %v155 = vld [vmem:[%s0 + $0x50] sm:$0xff]
  %v156 = vld [vmem:[%s0 + $0x58] sm:$0xff]
  %v157 = vld [vmem:[%s0 + $0x60] sm:$0xff]
  %v158 = vld [vmem:[%s0 + $0x68] sm:$0xff]
  %v159 = vld [vmem:[%s0 + $0x70] sm:$0xff]
  %v160 = vld [vmem:[%s0 + $0x78] sm:$0xff]
  %v161 = vld [vmem:[%s0 + $0x80] sm:$0xff]
  %v162 = vld [vmem:[%s0 + $0x88] sm:$0xff]
  %v163 = vld [vmem:[%s0 + $0x90] sm:$0xff]
  %v164 = vld [vmem:[%s0 + $0x98] sm:$0xff]
  %v165 = vld [vmem:[%s0 + $0xa0] sm:$0xff]
  %v166 = vld [vmem:[%s0 + $0xa8] sm:$0xff]
  %v167 = vld [vmem:[%s0 + $0xb0] sm:$0xff]
  %v168 = vld [vmem:[%s0 + $0xb8] sm:$0xff]
  %v169 = vld [vmem:[%s0 + $0xc0] sm:$0xff]
  %v170 = vld [vmem:[%s0 + $0xc8] sm:$0xff]
  %v171 = vld [vmem:[%s0 + $0xd0] sm:$0xff]
  %v172 = vld [vmem:[%s0 + $0xd8] sm:$0xff]
  %v173 = vld [vmem:[%s0 + $0xe0] sm:$0xff]
  %v174 = vld [vmem:[%s0 + $0xe8] sm:$0xff]
  %v175 = vld [vmem:[%s0 + $0xf0] sm:$0xff]
  %v176 = vld [vmem:[%s0 + $0xf8] sm:$0xff]
  %v177 = vld [vmem:[%s0 + $0x100] sm:$0xff]
  %v178 = vld [vmem:[%s0 + $0x108] sm:$0xff]
  %v179 = vld [vmem:[%s0 + $0x110] sm:$0xff]
  %v180 = vld [vmem:[%s0 + $0x118] sm:$0xff]
  %v181 = vld [vmem:[%s0 + $0x120] sm:$0xff]
  %v182 = vld [vmem:[%s0 + $0x128] sm:$0xff]
  %v183 = vld [vmem:[%s0 + $0x130] sm:$0xff]
  %v184 = vld [vmem:[%s0 + $0x138] sm:$0xff]
  %v185 = vld [vmem:[%s0 + $0x140] sm:$0xff]
  %v186 = vld [vmem:[%s0 + $0x148] sm:$0xff]
  %v187 = vld [vmem:[%s0 + $0x150] sm:$0xff]
  %v188 = vld [vmem:[%s0 + $0x158] sm:$0xff]
  %v189 = vld [vmem:[%s0 + $0x160] sm:$0xff]
  %v190 = vld [vmem:[%s0 + $0x168] sm:$0xff]
  %v191 = vld [vmem:[%s0 + $0x170] sm:$0xff]
  %v192 = vld [vmem:[%s0 + $0x178] sm:$0xff]
  %v193 = vld [vmem:[%s0 + $0x180] sm:$0xff]
  %v194 = vld [vmem:[%s0 + $0x188] sm:$0xff]
  %v195 = vld [vmem:[%s0 + $0x190] sm:$0xff]
  %v196 = vld [vmem:[%s0 + $0x198] sm:$0xff]
  %v197 = vld [vmem:[%s0 + $0x1a0] sm:$0xff]
  %v198 = vld [vmem:[%s0 + $0x1a8] sm:$0xff]
  %v199 = vld [vmem:[%s0 + $0x1b0] sm:$0xff]
  %v200 = vld [vmem:[%s0 + $0x1b8] sm:$0xff]
  %v201 = vld [vmem:[%s0 + $0x1c0] sm:$0xff]
  %v202 = vld [vmem:[%s0 + $0x1c8] sm:$0xff]
  %v203 = vld [vmem:[%s0 + $0x1d0] sm:$0xff]
  %v204 = vld [vmem:[%s0 + $0x1d8] sm:$0xff]
  %v205 = vld [vmem:[%s0 + $0x1e0] sm:$0xff]
  %v206 = vld [vmem:[%s0 + $0x1e8] sm:$0xff]
  %v207 = vld [vmem:[%s0 + $0x1f0] sm:$0xff]
  %v208 = vld [vmem:[%s0 + $0x1f8] sm:$0xff]
  %v209 = vld [vmem:[%s1] sm:$0xf]
  %v210 = vld [vmem:[%s1 + $0x4] sm:$0xf]
  %v211 = vld [vmem:[%s1 + $0x8] sm:$0xf]
  %v212 = vld [vmem:[%s1 + $0xc] sm:$0xf]
  %v213 = vld [vmem:[%s1 + $0x10] sm:$0xf]
  %v214 = vld [vmem:[%s1 + $0x14] sm:$0xf]
  %v215 = vld [vmem:[%s1 + $0x18] sm:$0xf]
  %v216 = vld [vmem:[%s1 + $0x1c] sm:$0xf]
  %v217 = vld [vmem:[%s1 + $0x20] sm:$0xf]
  %v218 = vld [vmem:[%s1 + $0x24] sm:$0xf]
  %v219 = vld [vmem:[%s1 + $0x28] sm:$0xf]
  %v220 = vld [vmem:[%s1 + $0x2c] sm:$0xf]
  %v221 = vld [vmem:[%s1 + $0x30] sm:$0xf]
  %v222 = vld [vmem:[%s1 + $0x34] sm:$0xf]
  %v223 = vld [vmem:[%s1 + $0x38] sm:$0xf]
  %v224 = vld [vmem:[%s1 + $0x3c] sm:$0xf]
  %v225 = vld [vmem:[%s1 + $0x40] sm:$0xf]
  %v226 = vld [vmem:[%s1 + $0x44] sm:$0xf]
  %v227 = vld [vmem:[%s1 + $0x48] sm:$0x3]
  %v292 = vunpack.c.l.b16 %v145
  %v293 = vunpack.c.h.b16 %v145
  %v294 = vunpack.c.l.b16 %v146
  %v295 = vunpack.c.h.b16 %v146
  %v296 = vunpack.c.l.b16 %v147
  %v297 = vunpack.c.h.b16 %v147
  %v298 = vunpack.c.l.b16 %v148
  %v299 = vunpack.c.h.b16 %v148
  %v300 = vunpack.c.l.b16 %v149
  %v301 = vunpack.c.h.b16 %v149
  %v302 = vunpack.c.l.b16 %v150
  %v303 = vunpack.c.h.b16 %v150
  %v304 = vunpack.c.l.b16 %v151
  %v305 = vunpack.c.h.b16 %v151
  %v306 = vunpack.c.l.b16 %v152
  %v307 = vunpack.c.h.b16 %v152
  %v308 = vunpack.c.l.b16 %v153
  %v309 = vunpack.c.h.b16 %v153
  %v310 = vunpack.c.l.b16 %v154
  %v311 = vunpack.c.h.b16 %v154
  %v312 = vunpack.c.l.b16 %v155
  %v313 = vunpack.c.h.b16 %v155
  %v314 = vunpack.c.l.b16 %v156
  %v315 = vunpack.c.h.b16 %v156
  %v316 = vunpack.c.l.b16 %v157
  %v317 = vunpack.c.h.b16 %v157
  %v318 = vunpack.c.l.b16 %v158
  %v319 = vunpack.c.h.b16 %v158
  %v320 = vunpack.c.l.b16 %v159
  %v321 = vunpack.c.h.b16 %v159
  %v322 = vunpack.c.l.b16 %v160
  %v323 = vunpack.c.h.b16 %v160
  %v324 = vunpack.c.l.b16 %v161
  %v325 = vunpack.c.h.b16 %v161
  %v326 = vunpack.c.l.b16 %v162
  %v327 = vunpack.c.h.b16 %v162
  %v328 = vunpack.c.l.b16 %v163
  %v329 = vunpack.c.h.b16 %v163
  %v330 = vunpack.c.l.b16 %v164
  %v331 = vunpack.c.h.b16 %v164
  %v332 = vunpack.c.l.b16 %v165
  %v333 = vunpack.c.h.b16 %v165
  %v334 = vunpack.c.l.b16 %v166
  %v335 = vunpack.c.h.b16 %v166
  %v336 = vunpack.c.l.b16 %v167
  %v337 = vunpack.c.h.b16 %v167
  %v338 = vunpack.c.l.b16 %v168
  %v339 = vunpack.c.h.b16 %v168
  %v340 = vunpack.c.l.b16 %v169
  %v341 = vunpack.c.h.b16 %v169
  %v342 = vunpack.c.l.b16 %v170
  %v343 = vunpack.c.h.b16 %v170
  %v344 = vunpack.c.l.b16 %v171
  %v345 = vunpack.c.h.b16 %v171
  %v346 = vunpack.c.l.b16 %v172
  %v347 = vunpack.c.h.b16 %v172
  %v348 = vunpack.c.l.b16 %v173
  %v349 = vunpack.c.h.b16 %v173
  %v350 = vunpack.c.l.b16 %v174
  %v351 = vunpack.c.h.b16 %v174
  %v352 = vunpack.c.l.b16 %v175
  %v353 = vunpack.c.h.b16 %v175
  %v354 = vunpack.c.l.b16 %v176
  %v355 = vunpack.c.h.b16 %v176
  %v356 = vunpack.c.l.b16 %v177
  %v357 = vunpack.c.h.b16 %v177
  %v358 = vunpack.c.l.b16 %v178
  %v359 = vunpack.c.h.b16 %v178
  %v360 = vunpack.c.l.b16 %v179
  %v361 = vunpack.c.h.b16 %v179
  %v362 = vunpack.c.l.b16 %v180
  %v363 = vunpack.c.h.b16 %v180
  %v364 = vunpack.c.l.b16 %v181
  %v365 = vunpack.c.h.b16 %v181
  %v366 = vunpack.c.l.b16 %v182
  %v367 = vunpack.c.h.b16 %v182
  %v368 = vunpack.c.l.b16 %v183
  %v369 = vunpack.c.h.b16 %v183
  %v370 = vunpack.c.l.b16 %v184
  %v371 = vunpack.c.h.b16 %v184
  %v372 = vunpack.c.l.b16 %v185
  %v373 = vunpack.c.h.b16 %v185
  %v374 = vunpack.c.l.b16 %v186
  %v375 = vunpack.c.h.b16 %v186
  %v376 = vunpack.c.l.b16 %v187
  %v377 = vunpack.c.h.b16 %v187
  %v378 = vunpack.c.l.b16 %v188
  %v379 = vunpack.c.h.b16 %v188
  %v380 = vunpack.c.l.b16 %v189
  %v381 = vunpack.c.h.b16 %v189
  %v382 = vunpack.c.l.b16 %v190
  %v383 = vunpack.c.h.b16 %v190
  %v384 = vunpack.c.l.b16 %v191
  %v385 = vunpack.c.h.b16 %v191
  %v386 = vunpack.c.l.b16 %v192
  %v387 = vunpack.c.h.b16 %v192
  %v388 = vunpack.c.l.b16 %v193
  %v389 = vunpack.c.h.b16 %v193
  %v390 = vunpack.c.l.b16 %v194
  %v391 = vunpack.c.h.b16 %v194
  %v392 = vunpack.c.l.b16 %v195
  %v393 = vunpack.c.h.b16 %v195
  %v394 = vunpack.c.l.b16 %v196
  %v395 = vunpack.c.h.b16 %v196
  %v396 = vunpack.c.l.b16 %v197
  %v397 = vunpack.c.h.b16 %v197
  %v398 = vunpack.c.l.b16 %v198
  %v399 = vunpack.c.h.b16 %v198
  %v400 = vunpack.c.l.b16 %v199
  %v401 = vunpack.c.h.b16 %v199
  %v402 = vunpack.c.l.b16 %v200
  %v403 = vunpack.c.h.b16 %v200
  %v404 = vunpack.c.l.b16 %v201
  %v405 = vunpack.c.h.b16 %v201
  %v406 = vunpack.c.l.b16 %v202
  %v407 = vunpack.c.h.b16 %v202
  %v408 = vunpack.c.l.b16 %v203
  %v409 = vunpack.c.h.b16 %v203
  %v410 = vunpack.c.l.b16 %v204
  %v411 = vunpack.c.h.b16 %v204
  %v412 = vunpack.c.l.b16 %v205
  %v413 = vunpack.c.h.b16 %v205
  %v414 = vunpack.c.l.b16 %v206
  %v415 = vunpack.c.h.b16 %v206
  %v416 = vunpack.c.l.b16 %v207
  %v417 = vunpack.c.h.b16 %v207
  %v418 = vunpack.c.l.b16 %v208
  %v419 = vunpack.c.h.b16 %v208
  %v420 = vpack.c.b16 %v294, %v292
  %v421 = vpack.c.b16 %v295, %v293
  %v422 = vpack.c.b16 %v298, %v296
  %v423 = vpack.c.b16 %v299, %v297
  %v424 = vpack.c.b16 %v302, %v300
  %v425 = vpack.c.b16 %v303, %v301
  %v426 = vpack.c.b16 %v306, %v304
  %v427 = vpack.c.b16 %v307, %v305
  %v428 = vpack.c.b16 %v310, %v308
  %v429 = vpack.c.b16 %v311, %v309
  %v430 = vpack.c.b16 %v314, %v312
  %v431 = vpack.c.b16 %v315, %v313
  %v432 = vpack.c.b16 %v318, %v316
  %v433 = vpack.c.b16 %v319, %v317
  %v434 = vpack.c.b16 %v322, %v320
  %v435 = vpack.c.b16 %v323, %v321
  %v436 = vpack.c.b16 %v326, %v324
  %v437 = vpack.c.b16 %v327, %v325
  %v438 = vpack.c.b16 %v330, %v328
  %v439 = vpack.c.b16 %v331, %v329
  %v440 = vpack.c.b16 %v334, %v332
  %v441 = vpack.c.b16 %v335, %v333
  %v442 = vpack.c.b16 %v338, %v336
  %v443 = vpack.c.b16 %v339, %v337
  %v444 = vpack.c.b16 %v342, %v340
  %v445 = vpack.c.b16 %v343, %v341
  %v446 = vpack.c.b16 %v346, %v344
  %v447 = vpack.c.b16 %v347, %v345
  %v448 = vpack.c.b16 %v350, %v348
  %v449 = vpack.c.b16 %v351, %v349
  %v450 = vpack.c.b16 %v354, %v352
  %v451 = vpack.c.b16 %v355, %v353
  %v452 = vpack.c.b16 %v358, %v356
  %v453 = vpack.c.b16 %v359, %v357
  %v454 = vpack.c.b16 %v362, %v360
  %v455 = vpack.c.b16 %v363, %v361
  %v456 = vpack.c.b16 %v366, %v364
  %v457 = vpack.c.b16 %v367, %v365
  %v458 = vpack.c.b16 %v370, %v368
  %v459 = vpack.c.b16 %v371, %v369
  %v460 = vpack.c.b16 %v374, %v372
  %v461 = vpack.c.b16 %v375, %v373
  %v462 = vpack.c.b16 %v378, %v376
  %v463 = vpack.c.b16 %v379, %v377
  %v464 = vpack.c.b16 %v382, %v380
  %v465 = vpack.c.b16 %v383, %v381
  %v466 = vpack.c.b16 %v386, %v384
  %v467 = vpack.c.b16 %v387, %v385
  %v468 = vpack.c.b16 %v390, %v388
  %v469 = vpack.c.b16 %v391, %v389
  %v470 = vpack.c.b16 %v394, %v392
  %v471 = vpack.c.b16 %v395, %v393
  %v472 = vpack.c.b16 %v398, %v396
  %v473 = vpack.c.b16 %v399, %v397
  %v474 = vpack.c.b16 %v402, %v400
  %v475 = vpack.c.b16 %v403, %v401
  %v476 = vpack.c.b16 %v406, %v404
  %v477 = vpack.c.b16 %v407, %v405
  %v478 = vpack.c.b16 %v410, %v408
  %v479 = vpack.c.b16 %v411, %v409
  %v480 = vpack.c.b16 %v414, %v412
  %v481 = vpack.c.b16 %v415, %v413
  %v482 = vpack.c.b16 %v418, %v416
  %v483 = vpack.c.b16 %v419, %v417
  %v535 = vunpack.c.l.b16 %v209
  %v536 = vunpack.c.l.b16 %v210
  %v537 = vunpack.c.l.b16 %v211
  %v538 = vunpack.c.l.b16 %v212
  %v539 = vunpack.c.l.b16 %v213
  %v540 = vunpack.c.l.b16 %v214
  %v541 = vunpack.c.l.b16 %v215
  %v542 = vunpack.c.l.b16 %v216
  %v543 = vunpack.c.l.b16 %v217
  %v544 = vunpack.c.l.b16 %v218
  %v545 = vunpack.c.l.b16 %v219
  %v546 = vunpack.c.l.b16 %v220
  %v547 = vunpack.c.l.b16 %v221
  %v548 = vunpack.c.l.b16 %v222
  %v549 = vunpack.c.l.b16 %v223
  %v550 = vunpack.c.l.b16 %v224
  %v551 = vunpack.c.l.b16 %v225
  %v552 = vunpack.c.l.b16 %v226
  %v553 = vunpack.c.l.b16 %v227
  %v554 = vpack.c.b16 %v536, %v535
  %v555 = vpack.c.b16 %v538, %v537
  %v556 = vpack.c.b16 %v540, %v539
  %v557 = vpack.c.b16 %v542, %v541
  %v558 = vpack.c.b16 %v544, %v543
  %v559 = vpack.c.b16 %v546, %v545
  %v560 = vpack.c.b16 %v548, %v547
  %v561 = vpack.c.b16 %v550, %v549
  %v562 = vpack.c.b16 %v552, %v551
  %v563 = vpack.c.b16 %v553, %v553
  %vm573 = vcmask 154624
  %v575 = vsel %vm573, %v421, 0
  %v578 = vsel %vm573, %v423, 0
  %v581 = vsel %vm573, %v425, 0
  %v584 = vsel %vm573, %v427, 0
  %v587 = vsel %vm573, %v429, 0
  %v590 = vsel %vm573, %v431, 0
  %v593 = vsel %vm573, %v433, 0
  %v596 = vsel %vm573, %v435, 0
  %v599 = vsel %vm573, %v437, 0
  %v602 = vsel %vm573, %v439, 0
  %v605 = vsel %vm573, %v441, 0
  %v608 = vsel %vm573, %v443, 0
  %v611 = vsel %vm573, %v445, 0
  %v614 = vsel %vm573, %v447, 0
  %v617 = vsel %vm573, %v449, 0
  %v620 = vsel %vm573, %v451, 0
  %v623 = vsel %vm573, %v453, 0
  %v626 = vsel %vm573, %v455, 0
  %v629 = vsel %vm573, %v457, 0
  %v632 = vsel %vm573, %v459, 0
  %v635 = vsel %vm573, %v461, 0
  %v638 = vsel %vm573, %v463, 0
  %v641 = vsel %vm573, %v465, 0
  %v644 = vsel %vm573, %v467, 0
  %v647 = vsel %vm573, %v469, 0
  %v650 = vsel %vm573, %v471, 0
  %v653 = vsel %vm573, %v473, 0
  %v656 = vsel %vm573, %v475, 0
  %v659 = vsel %vm573, %v477, 0
  %v662 = vsel %vm573, %v479, 0
  %v665 = vsel %vm573, %v481, 0
  %v668 = vsel %vm573, %v483, 0
  %vm670 = vcmask 1040384
  %vm671 = vcmask 1041408
  %v672 = vsel %vm670, 4294967295, 65535
  %v673 = vsel %vm671, %v672, 0
  %v675 = vand.u32 %v563, %v673
  %677 = vmatpush.bf16.msra.mxu0 %v561
  %678 = vmatpush.bf16.msra.mxu0 %v560
  %679 = vmatpush.bf16.msra.mxu0 %v559
  %680 = vmatpush.bf16.msra.mxu0 %v558
  %681 = vmatpush.bf16.msra.mxu0 %v557
  %682 = vmatpush.bf16.msra.mxu0 %v556
  %683 = vmatpush.bf16.msra.mxu0 %v555
  %684 = vmatpush.bf16.msra.mxu0 %v554
  %685 = vmatmul.bf16.gmra.mxu0 %v420
  %v686 = vpop.f32.mrf.mxu0
  %v687 = vadd.f32 0.0, %v686
  %v688 = vpop.f32.mrf.mxu0
  %v689 = vadd.f32 0.0, %v688
  %690 = vmatmul.bf16.gmra.mxu0 %v422
  %v691 = vpop.f32.mrf.mxu0
  %v692 = vadd.f32 0.0, %v691
  %v693 = vpop.f32.mrf.mxu0
  %v694 = vadd.f32 0.0, %v693
  %695 = vmatmul.bf16.gmra.mxu0 %v424
  %v696 = vpop.f32.mrf.mxu0
  %v697 = vadd.f32 0.0, %v696
  %v698 = vpop.f32.mrf.mxu0
  %v699 = vadd.f32 0.0, %v698
  %700 = vmatmul.bf16.gmra.mxu0 %v426
  %v701 = vpop.f32.mrf.mxu0
  %v702 = vadd.f32 0.0, %v701
  %v703 = vpop.f32.mrf.mxu0
  %v704 = vadd.f32 0.0, %v703
  %705 = vmatmul.bf16.gmra.mxu0 %v428
  %v706 = vpop.f32.mrf.mxu0
  %v707 = vadd.f32 0.0, %v706
  %v708 = vpop.f32.mrf.mxu0
  %v709 = vadd.f32 0.0, %v708
  %710 = vmatmul.bf16.gmra.mxu0 %v430
  %v711 = vpop.f32.mrf.mxu0
  %v712 = vadd.f32 0.0, %v711
  %v713 = vpop.f32.mrf.mxu0
  %v714 = vadd.f32 0.0, %v713
  %715 = vmatmul.bf16.gmra.mxu0 %v432
  %v716 = vpop.f32.mrf.mxu0
  %v717 = vadd.f32 0.0, %v716
  %v718 = vpop.f32.mrf.mxu0
  %v719 = vadd.f32 0.0, %v718
  %720 = vmatmul.bf16.gmra.mxu0 %v434
  %v721 = vpop.f32.mrf.mxu0
  %v722 = vadd.f32 0.0, %v721
  %v723 = vpop.f32.mrf.mxu0
  %v724 = vadd.f32 0.0, %v723
  %725 = vmatmul.bf16.gmra.mxu0 %v436
  %v726 = vpop.f32.mrf.mxu0
  %v727 = vadd.f32 0.0, %v726
  %v728 = vpop.f32.mrf.mxu0
  %v729 = vadd.f32 0.0, %v728
  %730 = vmatmul.bf16.gmra.mxu0 %v438
  %v731 = vpop.f32.mrf.mxu0
  %v732 = vadd.f32 0.0, %v731
  %v733 = vpop.f32.mrf.mxu0
  %v734 = vadd.f32 0.0, %v733
  %735 = vmatmul.bf16.gmra.mxu0 %v440
  %v736 = vpop.f32.mrf.mxu0
  %v737 = vadd.f32 0.0, %v736
  %v738 = vpop.f32.mrf.mxu0
  %v739 = vadd.f32 0.0, %v738
  %740 = vmatmul.bf16.gmra.mxu0 %v442
  %v741 = vpop.f32.mrf.mxu0
  %v742 = vadd.f32 0.0, %v741
  %v743 = vpop.f32.mrf.mxu0
  %v744 = vadd.f32 0.0, %v743
  %745 = vmatmul.bf16.gmra.mxu0 %v444
  %v746 = vpop.f32.mrf.mxu0
  %v747 = vadd.f32 0.0, %v746
  %v748 = vpop.f32.mrf.mxu0
  %v749 = vadd.f32 0.0, %v748
  %750 = vmatmul.bf16.gmra.mxu0 %v446
  %v751 = vpop.f32.mrf.mxu0
  %v752 = vadd.f32 0.0, %v751
  %v753 = vpop.f32.mrf.mxu0
  %v754 = vadd.f32 0.0, %v753
  %755 = vmatmul.bf16.gmra.mxu0 %v448
  %v756 = vpop.f32.mrf.mxu0
  %v757 = vadd.f32 0.0, %v756
  %v758 = vpop.f32.mrf.mxu0
  %v759 = vadd.f32 0.0, %v758
  %760 = vmatmul.bf16.gmra.mxu0 %v450
  %v761 = vpop.f32.mrf.mxu0
  %v762 = vadd.f32 0.0, %v761
  %v763 = vpop.f32.mrf.mxu0
  %v764 = vadd.f32 0.0, %v763
  %765 = vmatmul.bf16.gmra.mxu0 %v452
  %v766 = vpop.f32.mrf.mxu0
  %v767 = vadd.f32 0.0, %v766
  %v768 = vpop.f32.mrf.mxu0
  %v769 = vadd.f32 0.0, %v768
  %770 = vmatmul.bf16.gmra.mxu0 %v454
  %v771 = vpop.f32.mrf.mxu0
  %v772 = vadd.f32 0.0, %v771
  %v773 = vpop.f32.mrf.mxu0
  %v774 = vadd.f32 0.0, %v773
  %775 = vmatmul.bf16.gmra.mxu0 %v456
  %v776 = vpop.f32.mrf.mxu0
  %v777 = vadd.f32 0.0, %v776
  %v778 = vpop.f32.mrf.mxu0
  %v779 = vadd.f32 0.0, %v778
  %780 = vmatmul.bf16.gmra.mxu0 %v458
  %v781 = vpop.f32.mrf.mxu0
  %v782 = vadd.f32 0.0, %v781
  %v783 = vpop.f32.mrf.mxu0
  %v784 = vadd.f32 0.0, %v783
  %785 = vmatmul.bf16.gmra.mxu0 %v460
  %v786 = vpop.f32.mrf.mxu0
  %v787 = vadd.f32 0.0, %v786
  %v788 = vpop.f32.mrf.mxu0
  %v789 = vadd.f32 0.0, %v788
  %790 = vmatmul.bf16.gmra.mxu0 %v462
  %v791 = vpop.f32.mrf.mxu0
  %v792 = vadd.f32 0.0, %v791
  %v793 = vpop.f32.mrf.mxu0
  %v794 = vadd.f32 0.0, %v793
  %795 = vmatmul.bf16.gmra.mxu0 %v464
  %v796 = vpop.f32.mrf.mxu0
  %v797 = vadd.f32 0.0, %v796
  %v798 = vpop.f32.mrf.mxu0
  %v799 = vadd.f32 0.0, %v798
  %800 = vmatmul.bf16.gmra.mxu0 %v466
  %v801 = vpop.f32.mrf.mxu0
  %v802 = vadd.f32 0.0, %v801
  %v803 = vpop.f32.mrf.mxu0
  %v804 = vadd.f32 0.0, %v803
  %805 = vmatmul.bf16.gmra.mxu0 %v468
  %v806 = vpop.f32.mrf.mxu0
  %v807 = vadd.f32 0.0, %v806
  %v808 = vpop.f32.mrf.mxu0
  %v809 = vadd.f32 0.0, %v808
  %810 = vmatmul.bf16.gmra.mxu0 %v470
  %v811 = vpop.f32.mrf.mxu0
  %v812 = vadd.f32 0.0, %v811
  %v813 = vpop.f32.mrf.mxu0
  %v814 = vadd.f32 0.0, %v813
  %815 = vmatmul.bf16.gmra.mxu0 %v472
  %v816 = vpop.f32.mrf.mxu0
  %v817 = vadd.f32 0.0, %v816
  %v818 = vpop.f32.mrf.mxu0
  %v819 = vadd.f32 0.0, %v818
  %820 = vmatmul.bf16.gmra.mxu0 %v474
  %v821 = vpop.f32.mrf.mxu0
  %v822 = vadd.f32 0.0, %v821
  %v823 = vpop.f32.mrf.mxu0
  %v824 = vadd.f32 0.0, %v823
  %825 = vmatmul.bf16.gmra.mxu0 %v476
  %v826 = vpop.f32.mrf.mxu0
  %v827 = vadd.f32 0.0, %v826
  %v828 = vpop.f32.mrf.mxu0
  %v829 = vadd.f32 0.0, %v828
  %830 = vmatmul.bf16.gmra.mxu0 %v478
  %v831 = vpop.f32.mrf.mxu0
  %v832 = vadd.f32 0.0, %v831
  %v833 = vpop.f32.mrf.mxu0
  %v834 = vadd.f32 0.0, %v833
  %835 = vmatmul.bf16.gmra.mxu0 %v480
  %v836 = vpop.f32.mrf.mxu0
  %v837 = vadd.f32 0.0, %v836
  %v838 = vpop.f32.mrf.mxu0
  %v839 = vadd.f32 0.0, %v838
  %840 = vmatmul.bf16.gmra.mxu0 %v482
  %v841 = vpop.f32.mrf.mxu0
  %v842 = vadd.f32 0.0, %v841
  %v843 = vpop.f32.mrf.mxu0
  %v844 = vadd.f32 0.0, %v843
  %845 = vdwg.mxu0
  %846 = vmatpush.bf16.msra.mxu0 0
  %847 = vmatpush.bf16.msra.mxu0 0
  %848 = vmatpush.bf16.msra.mxu0 0
  %849 = vmatpush.bf16.msra.mxu0 0
  %850 = vmatpush.bf16.msra.mxu0 0
  %851 = vmatpush.bf16.msra.mxu0 0
  %852 = vmatpush.bf16.msra.mxu0 %v675
  %853 = vmatpush.bf16.msra.mxu0 %v562
  %854 = vmatmul.bf16.gmra.mxu0 %v575
  %v855 = vpop.f32.mrf.mxu0
  %v856 = vadd.f32 %v687, %v855
  %v857 = vpop.f32.mrf.mxu0
  %v858 = vadd.f32 %v689, %v857
  %859 = vmatmul.bf16.gmra.mxu0 %v578
  %v860 = vpop.f32.mrf.mxu0
  %v861 = vadd.f32 %v692, %v860
  %v862 = vpop.f32.mrf.mxu0
  %v863 = vadd.f32 %v694, %v862
  %864 = vmatmul.bf16.gmra.mxu0 %v581
  %v865 = vpop.f32.mrf.mxu0
  %v866 = vadd.f32 %v697, %v865
  %v867 = vpop.f32.mrf.mxu0
  %v868 = vadd.f32 %v699, %v867
  %869 = vmatmul.bf16.gmra.mxu0 %v584
  %v870 = vpop.f32.mrf.mxu0
  %v871 = vadd.f32 %v702, %v870
  %v872 = vpop.f32.mrf.mxu0
  %v873 = vadd.f32 %v704, %v872
  %874 = vmatmul.bf16.gmra.mxu0 %v587
  %v875 = vpop.f32.mrf.mxu0
  %v876 = vadd.f32 %v707, %v875
  %v877 = vpop.f32.mrf.mxu0
  %v878 = vadd.f32 %v709, %v877
  %879 = vmatmul.bf16.gmra.mxu0 %v590
  %v880 = vpop.f32.mrf.mxu0
  %v881 = vadd.f32 %v712, %v880
  %v882 = vpop.f32.mrf.mxu0
  %v883 = vadd.f32 %v714, %v882
  %884 = vmatmul.bf16.gmra.mxu0 %v593
  %v885 = vpop.f32.mrf.mxu0
  %v886 = vadd.f32 %v717, %v885
  %v887 = vpop.f32.mrf.mxu0
  %v888 = vadd.f32 %v719, %v887
  %889 = vmatmul.bf16.gmra.mxu0 %v596
  %v890 = vpop.f32.mrf.mxu0
  %v891 = vadd.f32 %v722, %v890
  %v892 = vpop.f32.mrf.mxu0
  %v893 = vadd.f32 %v724, %v892
  %894 = vmatmul.bf16.gmra.mxu0 %v599
  %v895 = vpop.f32.mrf.mxu0
  %v896 = vadd.f32 %v727, %v895
  %v897 = vpop.f32.mrf.mxu0
  %v898 = vadd.f32 %v729, %v897
  %899 = vmatmul.bf16.gmra.mxu0 %v602
  %v900 = vpop.f32.mrf.mxu0
  %v901 = vadd.f32 %v732, %v900
  %v902 = vpop.f32.mrf.mxu0
  %v903 = vadd.f32 %v734, %v902
  %904 = vmatmul.bf16.gmra.mxu0 %v605
  %v905 = vpop.f32.mrf.mxu0
  %v906 = vadd.f32 %v737, %v905
  %v907 = vpop.f32.mrf.mxu0
  %v908 = vadd.f32 %v739, %v907
  %909 = vmatmul.bf16.gmra.mxu0 %v608
  %v910 = vpop.f32.mrf.mxu0
  %v911 = vadd.f32 %v742, %v910
  %v912 = vpop.f32.mrf.mxu0
  %v913 = vadd.f32 %v744, %v912
  %914 = vmatmul.bf16.gmra.mxu0 %v611
  %v915 = vpop.f32.mrf.mxu0
  %v916 = vadd.f32 %v747, %v915
  %v917 = vpop.f32.mrf.mxu0
  %v918 = vadd.f32 %v749, %v917
  %919 = vmatmul.bf16.gmra.mxu0 %v614
  %v920 = vpop.f32.mrf.mxu0
  %v921 = vadd.f32 %v752, %v920
  %v922 = vpop.f32.mrf.mxu0
  %v923 = vadd.f32 %v754, %v922
  %924 = vmatmul.bf16.gmra.mxu0 %v617
  %v925 = vpop.f32.mrf.mxu0
  %v926 = vadd.f32 %v757, %v925
  %v927 = vpop.f32.mrf.mxu0
  %v928 = vadd.f32 %v759, %v927
  %929 = vmatmul.bf16.gmra.mxu0 %v620
  %v930 = vpop.f32.mrf.mxu0
  %v931 = vadd.f32 %v762, %v930
  %v932 = vpop.f32.mrf.mxu0
  %v933 = vadd.f32 %v764, %v932
  %934 = vmatmul.bf16.gmra.mxu0 %v623
  %v935 = vpop.f32.mrf.mxu0
  %v936 = vadd.f32 %v767, %v935
  %v937 = vpop.f32.mrf.mxu0
  %v938 = vadd.f32 %v769, %v937
  %939 = vmatmul.bf16.gmra.mxu0 %v626
  %v940 = vpop.f32.mrf.mxu0
  %v941 = vadd.f32 %v772, %v940
  %v942 = vpop.f32.mrf.mxu0
  %v943 = vadd.f32 %v774, %v942
  %944 = vmatmul.bf16.gmra.mxu0 %v629
  %v945 = vpop.f32.mrf.mxu0
  %v946 = vadd.f32 %v777, %v945
  %v947 = vpop.f32.mrf.mxu0
  %v948 = vadd.f32 %v779, %v947
  %949 = vmatmul.bf16.gmra.mxu0 %v632
  %v950 = vpop.f32.mrf.mxu0
  %v951 = vadd.f32 %v782, %v950
  %v952 = vpop.f32.mrf.mxu0
  %v953 = vadd.f32 %v784, %v952
  %954 = vmatmul.bf16.gmra.mxu0 %v635
  %v955 = vpop.f32.mrf.mxu0
  %v956 = vadd.f32 %v787, %v955
  %v957 = vpop.f32.mrf.mxu0
  %v958 = vadd.f32 %v789, %v957
  %959 = vmatmul.bf16.gmra.mxu0 %v638
  %v960 = vpop.f32.mrf.mxu0
  %v961 = vadd.f32 %v792, %v960
  %v962 = vpop.f32.mrf.mxu0
  %v963 = vadd.f32 %v794, %v962
  %964 = vmatmul.bf16.gmra.mxu0 %v641
  %v965 = vpop.f32.mrf.mxu0
  %v966 = vadd.f32 %v797, %v965
  %v967 = vpop.f32.mrf.mxu0
  %v968 = vadd.f32 %v799, %v967
  %969 = vmatmul.bf16.gmra.mxu0 %v644
  %v970 = vpop.f32.mrf.mxu0
  %v971 = vadd.f32 %v802, %v970
  %v972 = vpop.f32.mrf.mxu0
  %v973 = vadd.f32 %v804, %v972
  %974 = vmatmul.bf16.gmra.mxu0 %v647
  %v975 = vpop.f32.mrf.mxu0
  %v976 = vadd.f32 %v807, %v975
  %v977 = vpop.f32.mrf.mxu0
  %v978 = vadd.f32 %v809, %v977
  %979 = vmatmul.bf16.gmra.mxu0 %v650
  %v980 = vpop.f32.mrf.mxu0
  %v981 = vadd.f32 %v812, %v980
  %v982 = vpop.f32.mrf.mxu0
  %v983 = vadd.f32 %v814, %v982
  %984 = vmatmul.bf16.gmra.mxu0 %v653
  %v985 = vpop.f32.mrf.mxu0
  %v986 = vadd.f32 %v817, %v985
  %v987 = vpop.f32.mrf.mxu0
  %v988 = vadd.f32 %v819, %v987
  %989 = vmatmul.bf16.gmra.mxu0 %v656
  %v990 = vpop.f32.mrf.mxu0
  %v991 = vadd.f32 %v822, %v990
  %v992 = vpop.f32.mrf.mxu0
  %v993 = vadd.f32 %v824, %v992
  %994 = vmatmul.bf16.gmra.mxu0 %v659
  %v995 = vpop.f32.mrf.mxu0
  %v996 = vadd.f32 %v827, %v995
  %v997 = vpop.f32.mrf.mxu0
  %v998 = vadd.f32 %v829, %v997
  %999 = vmatmul.bf16.gmra.mxu0 %v662
  %v1000 = vpop.f32.mrf.mxu0
  %v1001 = vadd.f32 %v832, %v1000
  %v1002 = vpop.f32.mrf.mxu0
  %v1003 = vadd.f32 %v834, %v1002
  %1004 = vmatmul.bf16.gmra.mxu0 %v665
  %v1005 = vpop.f32.mrf.mxu0
  %v1006 = vadd.f32 %v837, %v1005
  %v1007 = vpop.f32.mrf.mxu0
  %v1008 = vadd.f32 %v839, %v1007
  %1009 = vmatmul.bf16.gmra.mxu0 %v668
  %v1010 = vpop.f32.mrf.mxu0
  %v1011 = vadd.f32 %v842, %v1010
  %v1012 = vpop.f32.mrf.mxu0
  %v1013 = vadd.f32 %v844, %v1012
  %1014 = vdwg.mxu0
  %v1015 = vadd.f32 %v81, %v856
  %v1016 = vadd.f32 %v82, %v858
  %v1017 = vadd.f32 %v83, %v861
  %v1018 = vadd.f32 %v84, %v863
  %v1019 = vadd.f32 %v85, %v866
  %v1020 = vadd.f32 %v86, %v868
  %v1021 = vadd.f32 %v87, %v871
  %v1022 = vadd.f32 %v88, %v873
  %v1023 = vadd.f32 %v89, %v876
  %v1024 = vadd.f32 %v90, %v878
  %v1025 = vadd.f32 %v91, %v881
  %v1026 = vadd.f32 %v92, %v883
  %v1027 = vadd.f32 %v93, %v886
  %v1028 = vadd.f32 %v94, %v888
  %v1029 = vadd.f32 %v95, %v891
  %v1030 = vadd.f32 %v96, %v893
  %v1031 = vadd.f32 %v97, %v896
  %v1032 = vadd.f32 %v98, %v898
  %v1033 = vadd.f32 %v99, %v901
  %v1034 = vadd.f32 %v100, %v903
  %v1035 = vadd.f32 %v101, %v906
  %v1036 = vadd.f32 %v102, %v908
  %v1037 = vadd.f32 %v103, %v911
  %v1038 = vadd.f32 %v104, %v913
  %v1039 = vadd.f32 %v105, %v916
  %v1040 = vadd.f32 %v106, %v918
  %v1041 = vadd.f32 %v107, %v921
  %v1042 = vadd.f32 %v108, %v923
  %v1043 = vadd.f32 %v109, %v926
  %v1044 = vadd.f32 %v110, %v928
  %v1045 = vadd.f32 %v111, %v931
  %v1046 = vadd.f32 %v112, %v933
  %v1047 = vadd.f32 %v113, %v936
  %v1048 = vadd.f32 %v114, %v938
  %v1049 = vadd.f32 %v115, %v941
  %v1050 = vadd.f32 %v116, %v943
  %v1051 = vadd.f32 %v117, %v946
  %v1052 = vadd.f32 %v118, %v948
  %v1053 = vadd.f32 %v119, %v951
  %v1054 = vadd.f32 %v120, %v953
  %v1055 = vadd.f32 %v121, %v956
  %v1056 = vadd.f32 %v122, %v958
  %v1057 = vadd.f32 %v123, %v961
  %v1058 = vadd.f32 %v124, %v963
  %v1059 = vadd.f32 %v125, %v966
  %v1060 = vadd.f32 %v126, %v968
  %v1061 = vadd.f32 %v127, %v971
  %v1062 = vadd.f32 %v128, %v973
  %v1063 = vadd.f32 %v129, %v976
  %v1064 = vadd.f32 %v130, %v978
  %v1065 = vadd.f32 %v131, %v981
  %v1066 = vadd.f32 %v132, %v983
  %v1067 = vadd.f32 %v133, %v986
  %v1068 = vadd.f32 %v134, %v988
  %v1069 = vadd.f32 %v135, %v991
  %v1070 = vadd.f32 %v136, %v993
  %v1071 = vadd.f32 %v137, %v996
  %v1072 = vadd.f32 %v138, %v998
  %v1073 = vadd.f32 %v139, %v1001
  %v1074 = vadd.f32 %v140, %v1003
  %v1075 = vadd.f32 %v141, %v1006
  %v1076 = vadd.f32 %v142, %v1008
  %v1077 = vadd.f32 %v143, %v1011
  %v1078 = vadd.f32 %v144, %v1013
  %vm1079 = vcmask 523264
  %1080 = vst.msk [vmem:[#allocation2] sm:$0xff] %vm1079, %v1015
  %1081 = vst.msk [vmem:[#allocation2 + $0x8] sm:$0xff] %vm1079, %v1016
  %1082 = vst.msk [vmem:[#allocation2 + $0x10] sm:$0xff] %vm1079, %v1017
  %1083 = vst.msk [vmem:[#allocation2 + $0x18] sm:$0xff] %vm1079, %v1018
  %1084 = vst.msk [vmem:[#allocation2 + $0x20] sm:$0xff] %vm1079, %v1019
  %1085 = vst.msk [vmem:[#allocation2 + $0x28] sm:$0xff] %vm1079, %v1020
  %1086 = vst.msk [vmem:[#allocation2 + $0x30] sm:$0xff] %vm1079, %v1021
  %1087 = vst.msk [vmem:[#allocation2 + $0x38] sm:$0xff] %vm1079, %v1022
  %1088 = vst.msk [vmem:[#allocation2 + $0x40] sm:$0xff] %vm1079, %v1023
  %1089 = vst.msk [vmem:[#allocation2 + $0x48] sm:$0xff] %vm1079, %v1024
  %1090 = vst.msk [vmem:[#allocation2 + $0x50] sm:$0xff] %vm1079, %v1025
  %1091 = vst.msk [vmem:[#allocation2 + $0x58] sm:$0xff] %vm1079, %v1026
  %1092 = vst.msk [vmem:[#allocation2 + $0x60] sm:$0xff] %vm1079, %v1027
  %1093 = vst.msk [vmem:[#allocation2 + $0x68] sm:$0xff] %vm1079, %v1028
  %1094 = vst.msk [vmem:[#allocation2 + $0x70] sm:$0xff] %vm1079, %v1029
  %1095 = vst.msk [vmem:[#allocation2 + $0x78] sm:$0xff] %vm1079, %v1030
  %1096 = vst.msk [vmem:[#allocation2 + $0x80] sm:$0xff] %vm1079, %v1031
  %1097 = vst.msk [vmem:[#allocation2 + $0x88] sm:$0xff] %vm1079, %v1032
  %1098 = vst.msk [vmem:[#allocation2 + $0x90] sm:$0xff] %vm1079, %v1033
  %1099 = vst.msk [vmem:[#allocation2 + $0x98] sm:$0xff] %vm1079, %v1034
  %1100 = vst.msk [vmem:[#allocation2 + $0xa0] sm:$0xff] %vm1079, %v1035
  %1101 = vst.msk [vmem:[#allocation2 + $0xa8] sm:$0xff] %vm1079, %v1036
  %1102 = vst.msk [vmem:[#allocation2 + $0xb0] sm:$0xff] %vm1079, %v1037
  %1103 = vst.msk [vmem:[#allocation2 + $0xb8] sm:$0xff] %vm1079, %v1038
  %1104 = vst.msk [vmem:[#allocation2 + $0xc0] sm:$0xff] %vm1079, %v1039
  %1105 = vst.msk [vmem:[#allocation2 + $0xc8] sm:$0xff] %vm1079, %v1040
  %1106 = vst.msk [vmem:[#allocation2 + $0xd0] sm:$0xff] %vm1079, %v1041
  %1107 = vst.msk [vmem:[#allocation2 + $0xd8] sm:$0xff] %vm1079, %v1042
  %1108 = vst.msk [vmem:[#allocation2 + $0xe0] sm:$0xff] %vm1079, %v1043
  %1109 = vst.msk [vmem:[#allocation2 + $0xe8] sm:$0xff] %vm1079, %v1044
  %1110 = vst.msk [vmem:[#allocation2 + $0xf0] sm:$0xff] %vm1079, %v1045
  %1111 = vst.msk [vmem:[#allocation2 + $0xf8] sm:$0xff] %vm1079, %v1046
  %1112 = vst.msk [vmem:[#allocation2 + $0x100] sm:$0xff] %vm1079, %v1047
  %1113 = vst.msk [vmem:[#allocation2 + $0x108] sm:$0xff] %vm1079, %v1048
  %1114 = vst.msk [vmem:[#allocation2 + $0x110] sm:$0xff] %vm1079, %v1049
  %1115 = vst.msk [vmem:[#allocation2 + $0x118] sm:$0xff] %vm1079, %v1050
  %1116 = vst.msk [vmem:[#allocation2 + $0x120] sm:$0xff] %vm1079, %v1051
  %1117 = vst.msk [vmem:[#allocation2 + $0x128] sm:$0xff] %vm1079, %v1052
  %1118 = vst.msk [vmem:[#allocation2 + $0x130] sm:$0xff] %vm1079, %v1053
  %1119 = vst.msk [vmem:[#allocation2 + $0x138] sm:$0xff] %vm1079, %v1054
  %1120 = vst.msk [vmem:[#allocation2 + $0x140] sm:$0xff] %vm1079, %v1055
  %1121 = vst.msk [vmem:[#allocation2 + $0x148] sm:$0xff] %vm1079, %v1056
  %1122 = vst.msk [vmem:[#allocation2 + $0x150] sm:$0xff] %vm1079, %v1057
  %1123 = vst.msk [vmem:[#allocation2 + $0x158] sm:$0xff] %vm1079, %v1058
  %1124 = vst.msk [vmem:[#allocation2 + $0x160] sm:$0xff] %vm1079, %v1059
  %1125 = vst.msk [vmem:[#allocation2 + $0x168] sm:$0xff] %vm1079, %v1060
  %1126 = vst.msk [vmem:[#allocation2 + $0x170] sm:$0xff] %vm1079, %v1061
  %1127 = vst.msk [vmem:[#allocation2 + $0x178] sm:$0xff] %vm1079, %v1062
  %1128 = vst.msk [vmem:[#allocation2 + $0x180] sm:$0xff] %vm1079, %v1063
  %1129 = vst.msk [vmem:[#allocation2 + $0x188] sm:$0xff] %vm1079, %v1064
  %1130 = vst.msk [vmem:[#allocation2 + $0x190] sm:$0xff] %vm1079, %v1065
  %1131 = vst.msk [vmem:[#allocation2 + $0x198] sm:$0xff] %vm1079, %v1066
  %1132 = vst.msk [vmem:[#allocation2 + $0x1a0] sm:$0xff] %vm1079, %v1067
  %1133 = vst.msk [vmem:[#allocation2 + $0x1a8] sm:$0xff] %vm1079, %v1068
  %1134 = vst.msk [vmem:[#allocation2 + $0x1b0] sm:$0xff] %vm1079, %v1069
  %1135 = vst.msk [vmem:[#allocation2 + $0x1b8] sm:$0xff] %vm1079, %v1070
  %1136 = vst.msk [vmem:[#allocation2 + $0x1c0] sm:$0xff] %vm1079, %v1071
  %1137 = vst.msk [vmem:[#allocation2 + $0x1c8] sm:$0xff] %vm1079, %v1072
  %1138 = vst.msk [vmem:[#allocation2 + $0x1d0] sm:$0xff] %vm1079, %v1073
  %1139 = vst.msk [vmem:[#allocation2 + $0x1d8] sm:$0xff] %vm1079, %v1074
  %1140 = vst.msk [vmem:[#allocation2 + $0x1e0] sm:$0xff] %vm1079, %v1075
  %1141 = vst.msk [vmem:[#allocation2 + $0x1e8] sm:$0xff] %vm1079, %v1076
  %1142 = vst.msk [vmem:[#allocation2 + $0x1f0] sm:$0xff] %vm1079, %v1077
  %1143 = vst.msk [vmem:[#allocation2 + $0x1f8] sm:$0xff] %vm1079, %v1078
  // Predicated region
  $region14: #{tpu_custom_call.1} parent=0 // pred_check
    %p1144 = pneg %p12
  $region15: #{tpu_custom_call.1} parent=0 // pred_check_branch
    %1146 = sbr.rel (%p1144) target = $region17
  $region16: #{tpu_custom_call.1} parent=0 // pred_region
    %v1147 = vld [vmem:[#allocation2] sm:$0xff]
    %v1148 = vld [vmem:[#allocation2 + $0x8] sm:$0xff]
    %v1149 = vld [vmem:[#allocation2 + $0x10] sm:$0xff]
    %v1150 = vld [vmem:[#allocation2 + $0x18] sm:$0xff]
    %v1151 = vld [vmem:[#allocation2 + $0x20] sm:$0xff]
    %v1152 = vld [vmem:[#allocation2 + $0x28] sm:$0xff]
    %v1153 = vld [vmem:[#allocation2 + $0x30] sm:$0xff]
    %v1154 = vld [vmem:[#allocation2 + $0x38] sm:$0xff]
    %v1155 = vld [vmem:[#allocation2 + $0x40] sm:$0xff]
    %v1156 = vld [vmem:[#allocation2 + $0x48] sm:$0xff]
    %v1157 = vld [vmem:[#allocation2 + $0x50] sm:$0xff]
    %v1158 = vld [vmem:[#allocation2 + $0x58] sm:$0xff]
    %v1159 = vld [vmem:[#allocation2 + $0x60] sm:$0xff]
    %v1160 = vld [vmem:[#allocation2 + $0x68] sm:$0xff]
    %v1161 = vld [vmem:[#allocation2 + $0x70] sm:$0xff]
    %v1162 = vld [vmem:[#allocation2 + $0x78] sm:$0xff]
    %v1163 = vld [vmem:[#allocation2 + $0x80] sm:$0xff]
    %v1164 = vld [vmem:[#allocation2 + $0x88] sm:$0xff]
    %v1165 = vld [vmem:[#allocation2 + $0x90] sm:$0xff]
    %v1166 = vld [vmem:[#allocation2 + $0x98] sm:$0xff]
    %v1167 = vld [vmem:[#allocation2 + $0xa0] sm:$0xff]
    %v1168 = vld [vmem:[#allocation2 + $0xa8] sm:$0xff]
    %v1169 = vld [vmem:[#allocation2 + $0xb0] sm:$0xff]
    %v1170 = vld [vmem:[#allocation2 + $0xb8] sm:$0xff]
    %v1171 = vld [vmem:[#allocation2 + $0xc0] sm:$0xff]
    %v1172 = vld [vmem:[#allocation2 + $0xc8] sm:$0xff]
    %v1173 = vld [vmem:[#allocation2 + $0xd0] sm:$0xff]
    %v1174 = vld [vmem:[#allocation2 + $0xd8] sm:$0xff]
    %v1175 = vld [vmem:[#allocation2 + $0xe0] sm:$0xff]
    %v1176 = vld [vmem:[#allocation2 + $0xe8] sm:$0xff]
    %v1177 = vld [vmem:[#allocation2 + $0xf0] sm:$0xff]
    %v1178 = vld [vmem:[#allocation2 + $0xf8] sm:$0xff]
    %v1179 = vld [vmem:[#allocation2 + $0x100] sm:$0xff]
    %v1180 = vld [vmem:[#allocation2 + $0x108] sm:$0xff]
    %v1181 = vld [vmem:[#allocation2 + $0x110] sm:$0xff]
    %v1182 = vld [vmem:[#allocation2 + $0x118] sm:$0xff]
    %v1183 = vld [vmem:[#allocation2 + $0x120] sm:$0xff]
    %v1184 = vld [vmem:[#allocation2 + $0x128] sm:$0xff]
    %v1185 = vld [vmem:[#allocation2 + $0x130] sm:$0xff]
    %v1186 = vld [vmem:[#allocation2 + $0x138] sm:$0xff]
    %v1187 = vld [vmem:[#allocation2 + $0x140] sm:$0xff]
    %v1188 = vld [vmem:[#allocation2 + $0x148] sm:$0xff]
    %v1189 = vld [vmem:[#allocation2 + $0x150] sm:$0xff]
    %v1190 = vld [vmem:[#allocation2 + $0x158] sm:$0xff]
    %v1191 = vld [vmem:[#allocation2 + $0x160] sm:$0xff]
    %v1192 = vld [vmem:[#allocation2 + $0x168] sm:$0xff]
    %v1193 = vld [vmem:[#allocation2 + $0x170] sm:$0xff]
    %v1194 = vld [vmem:[#allocation2 + $0x178] sm:$0xff]
    %v1195 = vld [vmem:[#allocation2 + $0x180] sm:$0xff]
    %v1196 = vld [vmem:[#allocation2 + $0x188] sm:$0xff]
    %v1197 = vld [vmem:[#allocation2 + $0x190] sm:$0xff]
    %v1198 = vld [vmem:[#allocation2 + $0x198] sm:$0xff]
    %v1199 = vld [vmem:[#allocation2 + $0x1a0] sm:$0xff]
    %v1200 = vld [vmem:[#allocation2 + $0x1a8] sm:$0xff]
    %v1201 = vld [vmem:[#allocation2 + $0x1b0] sm:$0xff]
    %v1202 = vld [vmem:[#allocation2 + $0x1b8] sm:$0xff]
    %v1203 = vld [vmem:[#allocation2 + $0x1c0] sm:$0xff]
    %v1204 = vld [vmem:[#allocation2 + $0x1c8] sm:$0xff]
    %v1205 = vld [vmem:[#allocation2 + $0x1d0] sm:$0xff]
    %v1206 = vld [vmem:[#allocation2 + $0x1d8] sm:$0xff]
    %v1207 = vld [vmem:[#allocation2 + $0x1e0] sm:$0xff]
    %v1208 = vld [vmem:[#allocation2 + $0x1e8] sm:$0xff]
    %v1209 = vld [vmem:[#allocation2 + $0x1f0] sm:$0xff]
    %v1210 = vld [vmem:[#allocation2 + $0x1f8] sm:$0xff]
    %v1211 = vpack.c.bf16 %v1147, %v1147
    %v1212 = vpack.c.bf16 %v1148, %v1148
    %v1213 = vpack.c.bf16 %v1149, %v1149
    %v1214 = vpack.c.bf16 %v1150, %v1150
    %v1215 = vpack.c.bf16 %v1151, %v1151
    %v1216 = vpack.c.bf16 %v1152, %v1152
    %v1217 = vpack.c.bf16 %v1153, %v1153
    %v1218 = vpack.c.bf16 %v1154, %v1154
    %v1219 = vpack.c.bf16 %v1155, %v1155
    %v1220 = vpack.c.bf16 %v1156, %v1156
    %v1221 = vpack.c.bf16 %v1157, %v1157
    %v1222 = vpack.c.bf16 %v1158, %v1158
    %v1223 = vpack.c.bf16 %v1159, %v1159
    %v1224 = vpack.c.bf16 %v1160, %v1160
    %v1225 = vpack.c.bf16 %v1161, %v1161
    %v1226 = vpack.c.bf16 %v1162, %v1162
    %v1227 = vpack.c.bf16 %v1163, %v1163
    %v1228 = vpack.c.bf16 %v1164, %v1164
    %v1229 = vpack.c.bf16 %v1165, %v1165
    %v1230 = vpack.c.bf16 %v1166, %v1166
    %v1231 = vpack.c.bf16 %v1167, %v1167
    %v1232 = vpack.c.bf16 %v1168, %v1168
    %v1233 = vpack.c.bf16 %v1169, %v1169
    %v1234 = vpack.c.bf16 %v1170, %v1170
    %v1235 = vpack.c.bf16 %v1171, %v1171
    %v1236 = vpack.c.bf16 %v1172, %v1172
    %v1237 = vpack.c.bf16 %v1173, %v1173
    %v1238 = vpack.c.bf16 %v1174, %v1174
    %v1239 = vpack.c.bf16 %v1175, %v1175
    %v1240 = vpack.c.bf16 %v1176, %v1176
    %v1241 = vpack.c.bf16 %v1177, %v1177
    %v1242 = vpack.c.bf16 %v1178, %v1178
    %v1243 = vpack.c.bf16 %v1179, %v1179
    %v1244 = vpack.c.bf16 %v1180, %v1180
    %v1245 = vpack.c.bf16 %v1181, %v1181
    %v1246 = vpack.c.bf16 %v1182, %v1182
    %v1247 = vpack.c.bf16 %v1183, %v1183
    %v1248 = vpack.c.bf16 %v1184, %v1184
    %v1249 = vpack.c.bf16 %v1185, %v1185
    %v1250 = vpack.c.bf16 %v1186, %v1186
    %v1251 = vpack.c.bf16 %v1187, %v1187
    %v1252 = vpack.c.bf16 %v1188, %v1188
    %v1253 = vpack.c.bf16 %v1189, %v1189
    %v1254 = vpack.c.bf16 %v1190, %v1190
    %v1255 = vpack.c.bf16 %v1191, %v1191
    %v1256 = vpack.c.bf16 %v1192, %v1192
    %v1257 = vpack.c.bf16 %v1193, %v1193
    %v1258 = vpack.c.bf16 %v1194, %v1194
    %v1259 = vpack.c.bf16 %v1195, %v1195
    %v1260 = vpack.c.bf16 %v1196, %v1196
    %v1261 = vpack.c.bf16 %v1197, %v1197
    %v1262 = vpack.c.bf16 %v1198, %v1198
    %v1263 = vpack.c.bf16 %v1199, %v1199
    %v1264 = vpack.c.bf16 %v1200, %v1200
    %v1265 = vpack.c.bf16 %v1201, %v1201
    %v1266 = vpack.c.bf16 %v1202, %v1202
    %v1267 = vpack.c.bf16 %v1203, %v1203
    %v1268 = vpack.c.bf16 %v1204, %v1204
    %v1269 = vpack.c.bf16 %v1205, %v1205
    %v1270 = vpack.c.bf16 %v1206, %v1206
    %v1271 = vpack.c.bf16 %v1207, %v1207
    %v1272 = vpack.c.bf16 %v1208, %v1208
    %v1273 = vpack.c.bf16 %v1209, %v1209
    %v1274 = vpack.c.bf16 %v1210, %v1210
    %vm1275 = vcmask 519168
    %1276 = vst.msk [vmem:[%s2] sm:$0xf] %vm1275, %v1211
    %1277 = vst.msk [vmem:[%s2 + $0x4] sm:$0xf] %vm1275, %v1212
    %1278 = vst.msk [vmem:[%s2 + $0x8] sm:$0xf] %vm1275, %v1213
    %1279 = vst.msk [vmem:[%s2 + $0xc] sm:$0xf] %vm1275, %v1214
    %1280 = vst.msk [vmem:[%s2 + $0x10] sm:$0xf] %vm1275, %v1215
    %1281 = vst.msk [vmem:[%s2 + $0x14] sm:$0xf] %vm1275, %v1216
    %1282 = vst.msk [vmem:[%s2 + $0x18] sm:$0xf] %vm1275, %v1217
    %1283 = vst.msk [vmem:[%s2 + $0x1c] sm:$0xf] %vm1275, %v1218
    %1284 = vst.msk [vmem:[%s2 + $0x20] sm:$0xf] %vm1275, %v1219
    %1285 = vst.msk [vmem:[%s2 + $0x24] sm:$0xf] %vm1275, %v1220
    %1286 = vst.msk [vmem:[%s2 + $0x28] sm:$0xf] %vm1275, %v1221
    %1287 = vst.msk [vmem:[%s2 + $0x2c] sm:$0xf] %vm1275, %v1222
    %1288 = vst.msk [vmem:[%s2 + $0x30] sm:$0xf] %vm1275, %v1223
    %1289 = vst.msk [vmem:[%s2 + $0x34] sm:$0xf] %vm1275, %v1224
    %1290 = vst.msk [vmem:[%s2 + $0x38] sm:$0xf] %vm1275, %v1225
    %1291 = vst.msk [vmem:[%s2 + $0x3c] sm:$0xf] %vm1275, %v1226
    %1292 = vst.msk [vmem:[%s2 + $0x40] sm:$0xf] %vm1275, %v1227
    %1293 = vst.msk [vmem:[%s2 + $0x44] sm:$0xf] %vm1275, %v1228
    %1294 = vst.msk [vmem:[%s2 + $0x48] sm:$0xf] %vm1275, %v1229
    %1295 = vst.msk [vmem:[%s2 + $0x4c] sm:$0xf] %vm1275, %v1230
    %1296 = vst.msk [vmem:[%s2 + $0x50] sm:$0xf] %vm1275, %v1231
    %1297 = vst.msk [vmem:[%s2 + $0x54] sm:$0xf] %vm1275, %v1232
    %1298 = vst.msk [vmem:[%s2 + $0x58] sm:$0xf] %vm1275, %v1233
    %1299 = vst.msk [vmem:[%s2 + $0x5c] sm:$0xf] %vm1275, %v1234
    %1300 = vst.msk [vmem:[%s2 + $0x60] sm:$0xf] %vm1275, %v1235
    %1301 = vst.msk [vmem:[%s2 + $0x64] sm:$0xf] %vm1275, %v1236
    %1302 = vst.msk [vmem:[%s2 + $0x68] sm:$0xf] %vm1275, %v1237
    %1303 = vst.msk [vmem:[%s2 + $0x6c] sm:$0xf] %vm1275, %v1238
    %1304 = vst.msk [vmem:[%s2 + $0x70] sm:$0xf] %vm1275, %v1239
    %1305 = vst.msk [vmem:[%s2 + $0x74] sm:$0xf] %vm1275, %v1240
    %1306 = vst.msk [vmem:[%s2 + $0x78] sm:$0xf] %vm1275, %v1241
    %1307 = vst.msk [vmem:[%s2 + $0x7c] sm:$0xf] %vm1275, %v1242
    %1308 = vst.msk [vmem:[%s2 + $0x80] sm:$0xf] %vm1275, %v1243
    %1309 = vst.msk [vmem:[%s2 + $0x84] sm:$0xf] %vm1275, %v1244
    %1310 = vst.msk [vmem:[%s2 + $0x88] sm:$0xf] %vm1275, %v1245
    %1311 = vst.msk [vmem:[%s2 + $0x8c] sm:$0xf] %vm1275, %v1246
    %1312 = vst.msk [vmem:[%s2 + $0x90] sm:$0xf] %vm1275, %v1247
    %1313 = vst.msk [vmem:[%s2 + $0x94] sm:$0xf] %vm1275, %v1248
    %1314 = vst.msk [vmem:[%s2 + $0x98] sm:$0xf] %vm1275, %v1249
    %1315 = vst.msk [vmem:[%s2 + $0x9c] sm:$0xf] %vm1275, %v1250
    %1316 = vst.msk [vmem:[%s2 + $0xa0] sm:$0xf] %vm1275, %v1251
    %1317 = vst.msk [vmem:[%s2 + $0xa4] sm:$0xf] %vm1275, %v1252
    %1318 = vst.msk [vmem:[%s2 + $0xa8] sm:$0xf] %vm1275, %v1253
    %1319 = vst.msk [vmem:[%s2 + $0xac] sm:$0xf] %vm1275, %v1254
    %1320 = vst.msk [vmem:[%s2 + $0xb0] sm:$0xf] %vm1275, %v1255
    %1321 = vst.msk [vmem:[%s2 + $0xb4] sm:$0xf] %vm1275, %v1256
    %1322 = vst.msk [vmem:[%s2 + $0xb8] sm:$0xf] %vm1275, %v1257
    %1323 = vst.msk [vmem:[%s2 + $0xbc] sm:$0xf] %vm1275, %v1258
    %1324 = vst.msk [vmem:[%s2 + $0xc0] sm:$0xf] %vm1275, %v1259
    %1325 = vst.msk [vmem:[%s2 + $0xc4] sm:$0xf] %vm1275, %v1260
    %1326 = vst.msk [vmem:[%s2 + $0xc8] sm:$0xf] %vm1275, %v1261
    %1327 = vst.msk [vmem:[%s2 + $0xcc] sm:$0xf] %vm1275, %v1262
    %1328 = vst.msk [vmem:[%s2 + $0xd0] sm:$0xf] %vm1275, %v1263
    %1329 = vst.msk [vmem:[%s2 + $0xd4] sm:$0xf] %vm1275, %v1264
    %1330 = vst.msk [vmem:[%s2 + $0xd8] sm:$0xf] %vm1275, %v1265
    %1331 = vst.msk [vmem:[%s2 + $0xdc] sm:$0xf] %vm1275, %v1266
    %1332 = vst.msk [vmem:[%s2 + $0xe0] sm:$0xf] %vm1275, %v1267
    %1333 = vst.msk [vmem:[%s2 + $0xe4] sm:$0xf] %vm1275, %v1268
    %1334 = vst.msk [vmem:[%s2 + $0xe8] sm:$0xf] %vm1275, %v1269
    %1335 = vst.msk [vmem:[%s2 + $0xec] sm:$0xf] %vm1275, %v1270
    %1336 = vst.msk [vmem:[%s2 + $0xf0] sm:$0xf] %vm1275, %v1271
    %1337 = vst.msk [vmem:[%s2 + $0xf4] sm:$0xf] %vm1275, %v1272
    %1338 = vst.msk [vmem:[%s2 + $0xf8] sm:$0xf] %vm1275, %v1273
    %1339 = vst.msk [vmem:[%s2 + $0xfc] sm:$0xf] %vm1275, %v1274
  $region17: #{tpu_custom_call.1} parent=0 // pred_fallthru
    _
  // Predicated region
  $region18: #{tpu_custom_call.1} parent=0 // pred_check
    _
  $region19: #{tpu_custom_call.1} parent=0 // pred_check_branch
    %1341 = sbr.rel (0) target = $region21
  $region20: #{tpu_custom_call.1} parent=0 // pred_region
    _
  $region21: #{tpu_custom_call.1} parent=0 // pred_fallthru
    _
  // Predicated region
  $region22: #{tpu_custom_call.1} parent=0 // pred_check
    _
  $region23: #{tpu_custom_call.1} parent=0 // pred_check_branch
    %1343 = sbr.rel (0) target = $region25
  $region24: #{tpu_custom_call.1} parent=0 // pred_region
    _
  $region25: #{tpu_custom_call.1} parent=0 // pred_fallthru
    _

</llo_original>
